<compile_context>
chip_gen: v7x
topology: tpu7x:2x2x1
jax: 0.10.0
libtpu: 0.0.40
codegen_flags: <defaults>
</compile_context>

<pallas_src>
from functools import partial

import numpy as np
import jax
import jax.numpy as jnp
from jax import lax
from jax.experimental import pallas as pl
from jax.experimental.pallas import tpu as pltpu


def _lstm2_kernel(B, T, x_ref, mask_ref, wih_t_ref, whh_t_ref, b_ref,
                  wout_t_ref, bout_ref, out_ref, gx_scr, h_all_scr):
    H, H4 = whh_t_ref.shape

    # --- Hoisted input projection: gates_x = x @ W_ih^T + (b_ih + b_hh), one big matmul ---
    # x_ref is already (T*B, I); result is lane-dense (T*B, 4H). No reshapes.
    gx_scr[...] = (jnp.dot(x_ref[...], wih_t_ref[...],
                           preferred_element_type=jnp.float32) + b_ref[...])

    whh_t = whh_t_ref[...]              # (H, 4H), loaded once, loop-invariant

    # --- Serial recurrence; only h @ W_hh^T lives on the per-step dependency chain ---
    def step(t, carry):
        h, c = carry
        row = pl.multiple_of(t * B, B)
        gates = gx_scr[pl.ds(row, B), :] + jnp.dot(
            h, whh_t, preferred_element_type=jnp.float32)          # (B, 4H)
        # Gate order was permuted to [i, f, o | g] in the wrapper:
        # sigmoid over the first 3H lanes, tanh only over the last H lanes.
        sig = jax.nn.sigmoid(gates[:, : 3 * H])
        g_g = jnp.tanh(gates[:, 3 * H:])
        i_g = sig[:, 0 * H:1 * H]
        f_g = sig[:, 1 * H:2 * H]
        o_g = sig[:, 2 * H:3 * H]
        c_new = f_g * c + i_g * g_g
        h_new = o_g * jnp.tanh(c_new)
        # Fold pad_packed masking into the store (mask is carry-independent -> off crit path).
        h_all_scr[pl.ds(row, B), :] = h_new * mask_ref[pl.ds(row, B), :]
        return h_new, c_new

    h0 = jnp.zeros((B, H), jnp.float32)
    c0 = jnp.zeros((B, H), jnp.float32)
    lax.fori_loop(0, T, step, (h0, c0), unroll=min(T, 8))

    # --- Fused output Linear + tanh; W_out^T is lane-padded to 128 -> unmasked full stores ---
    out_ref[...] = jnp.tanh(
        jnp.dot(h_all_scr[...], wout_t_ref[...], preferred_element_type=jnp.float32)
        + bout_ref[...])


def lstm2_forward(x, lengths, params):
    """x: (T, B, I) f32; lengths: (B,) int32 sorted descending; returns (T_out, B, O)."""
    T, B, I = x.shape
    w_ih, w_hh, b_ih, b_hh, w_out, b_out = (params[k] for k in
                                            ("w_ih", "w_hh", "b_ih", "b_hh", "w_out", "b_out"))
    H4 = w_ih.shape[0]
    H = H4 // 4
    O = w_out.shape[0]

    # pad_packed_sequence output length (lengths must be concrete here, as in the module spec).
    t_out = int(np.max(np.asarray(lengths)))
    TB = t_out * B

    # --- One-time wrapper-side layout plumbing (all loop-invariant) ---
    # Permute PyTorch gate order [i, f, g, o] -> [i, f, o, g] so the kernel applies
    # sigmoid to lanes 0:3H and tanh to lanes 3H:4H contiguously.
    perm = np.concatenate([np.arange(0, 2 * H), np.arange(3 * H, 4 * H),
                           np.arange(2 * H, 3 * H)])
    wih_t = jnp.asarray(w_ih)[perm].T                      # (I, 4H)
    whh_t = jnp.asarray(w_hh)[perm].T                      # (H, 4H)
    b_comb = (jnp.asarray(b_ih) + jnp.asarray(b_hh))[perm].reshape(1, H4)

    # Lane-dense output weights: zero-pad O=8 columns up to 128 lanes.
    OP = ((O + 127) // 128) * 128
    wout_t = jnp.zeros((H, OP), jnp.float32).at[:, :O].set(jnp.asarray(w_out).T)
    bout_p = jnp.zeros((1, OP), jnp.float32).at[:, :O].set(jnp.asarray(b_out).reshape(1, O))

    # Flatten x to (T*B, I); precompute the (T*B, 1) pad_packed validity mask.
    x2d = x[:t_out].reshape(TB, I)
    len_arr = jnp.asarray(lengths, jnp.int32)
    mask = (jnp.arange(t_out, dtype=jnp.int32)[:, None] < len_arr[None, :]) \
        .astype(jnp.float32).reshape(TB, 1)

    grid_spec = pltpu.PrefetchScalarGridSpec(
        num_scalar_prefetch=0,
        grid=(1,),                                     # single invocation; time loop in-kernel
        in_specs=[
            pl.BlockSpec((TB, I), lambda i: (0, 0)),   # x, pre-flattened
            pl.BlockSpec((TB, 1), lambda i: (0, 0)),   # validity mask
            pl.BlockSpec((I, H4), lambda i: (0, 0)),   # W_ih^T (permuted)
            pl.BlockSpec((H, H4), lambda i: (0, 0)),   # W_hh^T (permuted)
            pl.BlockSpec((1, H4), lambda i: (0, 0)),   # b_ih + b_hh (permuted)
            pl.BlockSpec((H, OP), lambda i: (0, 0)),   # W_out^T (lane-padded)
            pl.BlockSpec((1, OP), lambda i: (0, 0)),   # b_out (lane-padded)
        ],
        out_specs=pl.BlockSpec((TB, OP), lambda i: (0, 0)),
        scratch_shapes=[
            pltpu.VMEM((TB, H4), jnp.float32),         # precomputed input-projection gates
            pltpu.VMEM((TB, H), jnp.float32),          # masked hidden states
        ],
    )

    out_flat = pl.pallas_call(
        partial(_lstm2_kernel, B, t_out),
        out_shape=jax.ShapeDtypeStruct((TB, OP), jnp.float32),
        grid_spec=grid_spec,
        compiler_params=pltpu.CompilerParams(dimension_semantics=("arbitrary",)),
    )(x2d, mask, wih_t, whh_t, b_comb, wout_t, bout_p)

    # Strip the lane padding and restore (T_out, B, O) time-major layout.
    return out_flat[:, :O].reshape(t_out, B, O)


def _reference_forward(x, lengths, params):
    """Plain-JAX reference of the same semantics (for verification)."""
    w_ih, w_hh, b_ih, b_hh, w_out, b_out = (params[k] for k in
                                            ("w_ih", "w_hh", "b_ih", "b_hh", "w_out", "b_out"))
    H = w_hh.shape[1]
    t_out = int(np.max(np.asarray(lengths)))
    x = x[:t_out]
    B = x.shape[1]
    h = jnp.zeros((B, H), jnp.float32)
    c = jnp.zeros((B, H), jnp.float32)
    outs = []
    for t in range(t_out):
        gates = x[t] @ w_ih.T + h @ w_hh.T + b_ih + b_hh
        i_g = jax.nn.sigmoid(gates[:, 0 * H:1 * H])
        f_g = jax.nn.sigmoid(gates[:, 1 * H:2 * H])
        g_g = jnp.tanh(gates[:, 2 * H:3 * H])
        o_g = jax.nn.sigmoid(gates[:, 3 * H:4 * H])
        c = f_g * c + i_g * g_g
        h = o_g * jnp.tanh(c)
        mask = (t < jnp.asarray(lengths))[:, None]
        h_m = jnp.where(mask, h, 0.0)
        outs.append(jnp.tanh(h_m @ w_out.T + b_out))
    return jnp.stack(outs, axis=0)


def init_params(key, input_size, hidden_size, output_size):
    # PyTorch LSTM / Linear default init: U(-1/sqrt(H), 1/sqrt(H)).
    ks = jax.random.split(key, 6)
    s_lstm = 1.0 / np.sqrt(hidden_size)
    s_lin = 1.0 / np.sqrt(hidden_size)
    return {
        "w_ih": jax.random.uniform(ks[0], (4 * hidden_size, input_size), jnp.float32, -s_lstm, s_lstm),
        "w_hh": jax.random.uniform(ks[1], (4 * hidden_size, hidden_size), jnp.float32, -s_lstm, s_lstm),
        "b_ih": jax.random.uniform(ks[2], (4 * hidden_size,), jnp.float32, -s_lstm, s_lstm),
        "b_hh": jax.random.uniform(ks[3], (4 * hidden_size,), jnp.float32, -s_lstm, s_lstm),
        "w_out": jax.random.uniform(ks[4], (output_size, hidden_size), jnp.float32, -s_lin, s_lin),
        "b_out": jax.random.uniform(ks[5], (output_size,), jnp.float32, -s_lin, s_lin),
    }


if __name__ == "__main__":
    # Small shapes consistent with the module: seq=8, batch=8, input=16, hidden=32, output=8
    T, B, I, H, O = 8, 8, 16, 32, 8
    key = jax.random.PRNGKey(0)
    k_x, k_p = jax.random.split(key)

    x = jax.random.normal(k_x, (T, B, I), jnp.float32)
    # lengths sorted descending (pack_padded_sequence with enforce_sorted=True)
    lengths = np.array([8, 7, 6, 5, 5, 4, 3, 2], dtype=np.int32)
    params = init_params(k_p, I, H, O)

    # NOTE: self.dropout has p=0 (default), i.e. identity.
    # TODO(synk): dropout with p>0 in training mode is not implemented in-kernel.
    out = lstm2_forward(x, lengths, params)
    out = jax.block_until_ready(out)

    ref = _reference_forward(x, lengths, params)
    np.testing.assert_allclose(np.asarray(out), np.asarray(ref), rtol=1e-5, atol=1e-5)

    print("KERNEL_OK")
</pallas_src>

<mosaic_0001>
module attributes {stable_mosaic.version = 11 : i64} {
  func.func @_lstm2_kernel(%arg0: i32, %arg1: memref<64x16xf32, #tpu.memory_space<vmem>>, %arg2: memref<64x1xf32, #tpu.memory_space<vmem>>, %arg3: memref<16x128xf32, #tpu.memory_space<vmem>>, %arg4: memref<32x128xf32, #tpu.memory_space<vmem>>, %arg5: memref<1x128xf32, #tpu.memory_space<vmem>>, %arg6: memref<32x128xf32, #tpu.memory_space<vmem>>, %arg7: memref<1x128xf32, #tpu.memory_space<vmem>>, %arg8: memref<64x128xf32, #tpu.memory_space<vmem>>, %arg9: memref<64x128xf32, #tpu.memory_space<vmem>>, %arg10: memref<64x32xf32, #tpu.memory_space<vmem>>) attributes {dimension_semantics = [#tpu.dimension_semantics<arbitrary>], iteration_bounds = array<i64: 1>, scalar_prefetch = 0 : i64, scratch_operands = 2 : i64, tpu.core_type = #tpu.core_type<tc>, window_params = [{pipeline_mode = #tpu.pipeline_mode<synchronous>, transform_indices = @transform_0, window_bounds = array<i64: 64, 16>}, {pipeline_mode = #tpu.pipeline_mode<synchronous>, transform_indices = @transform_1, window_bounds = array<i64: 64, 1>}, {pipeline_mode = #tpu.pipeline_mode<synchronous>, transform_indices = @transform_2, window_bounds = array<i64: 16, 128>}, {pipeline_mode = #tpu.pipeline_mode<synchronous>, transform_indices = @transform_3, window_bounds = array<i64: 32, 128>}, {pipeline_mode = #tpu.pipeline_mode<synchronous>, transform_indices = @transform_4, window_bounds = array<i64: 1, 128>}, {pipeline_mode = #tpu.pipeline_mode<synchronous>, transform_indices = @transform_5, window_bounds = array<i64: 32, 128>}, {pipeline_mode = #tpu.pipeline_mode<synchronous>, transform_indices = @transform_6, window_bounds = array<i64: 1, 128>}, {pipeline_mode = #tpu.pipeline_mode<synchronous>, transform_indices = @transform_7, window_bounds = array<i64: 64, 128>}]} {
    %c0 = arith.constant 0 : index
    %c0_0 = arith.constant 0 : index
    %0 = vector.load %arg1[%c0, %c0_0] : memref<64x16xf32, #tpu.memory_space<vmem>>, vector<64x16xf32>
    %c0_1 = arith.constant 0 : index
    %c0_2 = arith.constant 0 : index
    %1 = vector.load %arg3[%c0_1, %c0_2] : memref<16x128xf32, #tpu.memory_space<vmem>>, vector<16x128xf32>
    %cst = arith.constant dense<0.000000e+00> : vector<64x128xf32>
    %2 = tpu.matmul %0, %1, %cst {dimension_numbers = #tpu.dot_dimension_numbers<[1], [0], [0], [1], [0, 0, 1, 1], [], []>} : vector<64x16xf32>, vector<16x128xf32>, vector<64x128xf32> -> vector<64x128xf32>
    %c0_3 = arith.constant 0 : index
    %c0_4 = arith.constant 0 : index
    %3 = vector.load %arg5[%c0_3, %c0_4] : memref<1x128xf32, #tpu.memory_space<vmem>>, vector<1x128xf32>
    %4 = vector.broadcast %3 : vector<1x128xf32> to vector<64x128xf32>
    %5 = arith.addf %2, %4 : vector<64x128xf32>
    %c0_5 = arith.constant 0 : index
    %c0_6 = arith.constant 0 : index
    %6 = vector.load %arg9[%c0_5, %c0_6] : memref<64x128xf32, #tpu.memory_space<vmem>>, vector<64x128xf32>
    tpu.vector_store %arg9[%c0_5, %c0_6], %5 {strides = array<i32>} : memref<64x128xf32, #tpu.memory_space<vmem>>, vector<64x128xf32>,
    %c0_7 = arith.constant 0 : index
    %c0_8 = arith.constant 0 : index
    %7 = vector.load %arg4[%c0_7, %c0_8] : memref<32x128xf32, #tpu.memory_space<vmem>>, vector<32x128xf32>
    %cst_9 = arith.constant 0.000000e+00 : f32
    %8 = vector.broadcast %cst_9 : f32 to vector<8x32xf32>
    %cst_10 = arith.constant 0.000000e+00 : f32
    %9 = vector.broadcast %cst_10 : f32 to vector<8x32xf32>
    %c0_i32 = arith.constant 0 : i32
    %c8_i32 = arith.constant 8 : i32
    %10 = arith.muli %c0_i32, %c8_i32 : i32
    %11 = tpu.assume_multiple %10, 8 : i32
    %12 = arith.index_cast %11 : i32 to index
    %c0_11 = arith.constant 0 : index
    %13 = vector.load %arg9[%12, %c0_11] : memref<64x128xf32, #tpu.memory_space<vmem>>, vector<8x128xf32>
    %cst_12 = arith.constant dense<0.000000e+00> : vector<8x128xf32>
    %14 = tpu.matmul %8, %7, %cst_12 {dimension_numbers = #tpu.dot_dimension_numbers<[1], [0], [0], [1], [0, 0, 1, 1], [], []>} : vector<8x32xf32>, vector<32x128xf32>, vector<8x128xf32> -> vector<8x128xf32>
    %15 = arith.addf %13, %14 : vector<8x128xf32>
    %16 = vector.extract_strided_slice %15 {offsets = [0, 0], sizes = [8, 96], strides = [1, 1]} : vector<8x128xf32> to vector<8x96xf32>
    %17 = arith.negf %16 : vector<8x96xf32>
    %18 = math.exp %17 : vector<8x96xf32>
    %cst_13 = arith.constant 1.000000e+00 : f32
    %19 = vector.broadcast %cst_13 : f32 to vector<8x96xf32>
    %20 = arith.addf %19, %18 : vector<8x96xf32>
    %21 = arith.divf %19, %20 : vector<8x96xf32>
    %22 = vector.extract_strided_slice %15 {offsets = [0, 96], sizes = [8, 32], strides = [1, 1]} : vector<8x128xf32> to vector<8x32xf32>
    %23 = math.tanh %22 : vector<8x32xf32>
    %24 = vector.extract_strided_slice %21 {offsets = [0, 0], sizes = [8, 32], strides = [1, 1]} : vector<8x96xf32> to vector<8x32xf32>
    %25 = vector.extract_strided_slice %21 {offsets = [0, 32], sizes = [8, 32], strides = [1, 1]} : vector<8x96xf32> to vector<8x32xf32>
    %26 = vector.extract_strided_slice %21 {offsets = [0, 64], sizes = [8, 32], strides = [1, 1]} : vector<8x96xf32> to vector<8x32xf32>
    %27 = arith.mulf %25, %9 : vector<8x32xf32>
    %28 = arith.mulf %24, %23 : vector<8x32xf32>
    %29 = arith.addf %27, %28 : vector<8x32xf32>
    %30 = math.tanh %29 : vector<8x32xf32>
    %31 = arith.mulf %26, %30 : vector<8x32xf32>
    %32 = arith.index_cast %11 : i32 to index
    %c0_14 = arith.constant 0 : index
    %33 = vector.load %arg2[%32, %c0_14] : memref<64x1xf32, #tpu.memory_space<vmem>>, vector<8x1xf32>
    %34 = vector.broadcast %33 : vector<8x1xf32> to vector<8x32xf32>
    %35 = arith.mulf %31, %34 : vector<8x32xf32>
    %36 = arith.index_cast %11 : i32 to index
    %c0_15 = arith.constant 0 : index
    %37 = vector.load %arg10[%36, %c0_15] : memref<64x32xf32, #tpu.memory_space<vmem>>, vector<8x32xf32>
    tpu.vector_store %arg10[%36, %c0_15], %35 {strides = array<i32>} : memref<64x32xf32, #tpu.memory_space<vmem>>, vector<8x32xf32>,
    %c1_i32 = arith.constant 1 : i32
    %c8_i32_16 = arith.constant 8 : i32
    %38 = arith.muli %c1_i32, %c8_i32_16 : i32
    %39 = tpu.assume_multiple %38, 8 : i32
    %40 = arith.index_cast %39 : i32 to index
    %c0_17 = arith.constant 0 : index
    %41 = vector.load %arg9[%40, %c0_17] : memref<64x128xf32, #tpu.memory_space<vmem>>, vector<8x128xf32>
    %cst_18 = arith.constant dense<0.000000e+00> : vector<8x128xf32>
    %42 = tpu.matmul %31, %7, %cst_18 {dimension_numbers = #tpu.dot_dimension_numbers<[1], [0], [0], [1], [0, 0, 1, 1], [], []>} : vector<8x32xf32>, vector<32x128xf32>, vector<8x128xf32> -> vector<8x128xf32>
    %43 = arith.addf %41, %42 : vector<8x128xf32>
    %44 = vector.extract_strided_slice %43 {offsets = [0, 0], sizes = [8, 96], strides = [1, 1]} : vector<8x128xf32> to vector<8x96xf32>
    %45 = arith.negf %44 : vector<8x96xf32>
    %46 = math.exp %45 : vector<8x96xf32>
    %cst_19 = arith.constant 1.000000e+00 : f32
    %47 = vector.broadcast %cst_19 : f32 to vector<8x96xf32>
    %48 = arith.addf %47, %46 : vector<8x96xf32>
    %49 = arith.divf %47, %48 : vector<8x96xf32>
    %50 = vector.extract_strided_slice %43 {offsets = [0, 96], sizes = [8, 32], strides = [1, 1]} : vector<8x128xf32> to vector<8x32xf32>
    %51 = math.tanh %50 : vector<8x32xf32>
    %52 = vector.extract_strided_slice %49 {offsets = [0, 0], sizes = [8, 32], strides = [1, 1]} : vector<8x96xf32> to vector<8x32xf32>
    %53 = vector.extract_strided_slice %49 {offsets = [0, 32], sizes = [8, 32], strides = [1, 1]} : vector<8x96xf32> to vector<8x32xf32>
    %54 = vector.extract_strided_slice %49 {offsets = [0, 64], sizes = [8, 32], strides = [1, 1]} : vector<8x96xf32> to vector<8x32xf32>
    %55 = arith.mulf %53, %29 : vector<8x32xf32>
    %56 = arith.mulf %52, %51 : vector<8x32xf32>
    %57 = arith.addf %55, %56 : vector<8x32xf32>
    %58 = math.tanh %57 : vector<8x32xf32>
    %59 = arith.mulf %54, %58 : vector<8x32xf32>
    %60 = arith.index_cast %39 : i32 to index
    %c0_20 = arith.constant 0 : index
    %61 = vector.load %arg2[%60, %c0_20] : memref<64x1xf32, #tpu.memory_space<vmem>>, vector<8x1xf32>
    %62 = vector.broadcast %61 : vector<8x1xf32> to vector<8x32xf32>
    %63 = arith.mulf %59, %62 : vector<8x32xf32>
    %64 = arith.index_cast %39 : i32 to index
    %c0_21 = arith.constant 0 : index
    %65 = vector.load %arg10[%64, %c0_21] : memref<64x32xf32, #tpu.memory_space<vmem>>, vector<8x32xf32>
    tpu.vector_store %arg10[%64, %c0_21], %63 {strides = array<i32>} : memref<64x32xf32, #tpu.memory_space<vmem>>, vector<8x32xf32>,
    %c2_i32 = arith.constant 2 : i32
    %c8_i32_22 = arith.constant 8 : i32
    %66 = arith.muli %c2_i32, %c8_i32_22 : i32
    %67 = tpu.assume_multiple %66, 8 : i32
    %68 = arith.index_cast %67 : i32 to index
    %c0_23 = arith.constant 0 : index
    %69 = vector.load %arg9[%68, %c0_23] : memref<64x128xf32, #tpu.memory_space<vmem>>, vector<8x128xf32>
    %cst_24 = arith.constant dense<0.000000e+00> : vector<8x128xf32>
    %70 = tpu.matmul %59, %7, %cst_24 {dimension_numbers = #tpu.dot_dimension_numbers<[1], [0], [0], [1], [0, 0, 1, 1], [], []>} : vector<8x32xf32>, vector<32x128xf32>, vector<8x128xf32> -> vector<8x128xf32>
    %71 = arith.addf %69, %70 : vector<8x128xf32>
    %72 = vector.extract_strided_slice %71 {offsets = [0, 0], sizes = [8, 96], strides = [1, 1]} : vector<8x128xf32> to vector<8x96xf32>
    %73 = arith.negf %72 : vector<8x96xf32>
    %74 = math.exp %73 : vector<8x96xf32>
    %cst_25 = arith.constant 1.000000e+00 : f32
    %75 = vector.broadcast %cst_25 : f32 to vector<8x96xf32>
    %76 = arith.addf %75, %74 : vector<8x96xf32>
    %77 = arith.divf %75, %76 : vector<8x96xf32>
    %78 = vector.extract_strided_slice %71 {offsets = [0, 96], sizes = [8, 32], strides = [1, 1]} : vector<8x128xf32> to vector<8x32xf32>
    %79 = math.tanh %78 : vector<8x32xf32>
    %80 = vector.extract_strided_slice %77 {offsets = [0, 0], sizes = [8, 32], strides = [1, 1]} : vector<8x96xf32> to vector<8x32xf32>
    %81 = vector.extract_strided_slice %77 {offsets = [0, 32], sizes = [8, 32], strides = [1, 1]} : vector<8x96xf32> to vector<8x32xf32>
    %82 = vector.extract_strided_slice %77 {offsets = [0, 64], sizes = [8, 32], strides = [1, 1]} : vector<8x96xf32> to vector<8x32xf32>
    %83 = arith.mulf %81, %57 : vector<8x32xf32>
    %84 = arith.mulf %80, %79 : vector<8x32xf32>
    %85 = arith.addf %83, %84 : vector<8x32xf32>
    %86 = math.tanh %85 : vector<8x32xf32>
    %87 = arith.mulf %82, %86 : vector<8x32xf32>
    %88 = arith.index_cast %67 : i32 to index
    %c0_26 = arith.constant 0 : index
    %89 = vector.load %arg2[%88, %c0_26] : memref<64x1xf32, #tpu.memory_space<vmem>>, vector<8x1xf32>
    %90 = vector.broadcast %89 : vector<8x1xf32> to vector<8x32xf32>
    %91 = arith.mulf %87, %90 : vector<8x32xf32>
    %92 = arith.index_cast %67 : i32 to index
    %c0_27 = arith.constant 0 : index
    %93 = vector.load %arg10[%92, %c0_27] : memref<64x32xf32, #tpu.memory_space<vmem>>, vector<8x32xf32>
    tpu.vector_store %arg10[%92, %c0_27], %91 {strides = array<i32>} : memref<64x32xf32, #tpu.memory_space<vmem>>, vector<8x32xf32>,
    %c3_i32 = arith.constant 3 : i32
    %c8_i32_28 = arith.constant 8 : i32
    %94 = arith.muli %c3_i32, %c8_i32_28 : i32
    %95 = tpu.assume_multiple %94, 8 : i32
    %96 = arith.index_cast %95 : i32 to index
    %c0_29 = arith.constant 0 : index
    %97 = vector.load %arg9[%96, %c0_29] : memref<64x128xf32, #tpu.memory_space<vmem>>, vector<8x128xf32>
    %cst_30 = arith.constant dense<0.000000e+00> : vector<8x128xf32>
    %98 = tpu.matmul %87, %7, %cst_30 {dimension_numbers = #tpu.dot_dimension_numbers<[1], [0], [0], [1], [0, 0, 1, 1], [], []>} : vector<8x32xf32>, vector<32x128xf32>, vector<8x128xf32> -> vector<8x128xf32>
    %99 = arith.addf %97, %98 : vector<8x128xf32>
    %100 = vector.extract_strided_slice %99 {offsets = [0, 0], sizes = [8, 96], strides = [1, 1]} : vector<8x128xf32> to vector<8x96xf32>
    %101 = arith.negf %100 : vector<8x96xf32>
    %102 = math.exp %101 : vector<8x96xf32>
    %cst_31 = arith.constant 1.000000e+00 : f32
    %103 = vector.broadcast %cst_31 : f32 to vector<8x96xf32>
    %104 = arith.addf %103, %102 : vector<8x96xf32>
    %105 = arith.divf %103, %104 : vector<8x96xf32>
    %106 = vector.extract_strided_slice %99 {offsets = [0, 96], sizes = [8, 32], strides = [1, 1]} : vector<8x128xf32> to vector<8x32xf32>
    %107 = math.tanh %106 : vector<8x32xf32>
    %108 = vector.extract_strided_slice %105 {offsets = [0, 0], sizes = [8, 32], strides = [1, 1]} : vector<8x96xf32> to vector<8x32xf32>
    %109 = vector.extract_strided_slice %105 {offsets = [0, 32], sizes = [8, 32], strides = [1, 1]} : vector<8x96xf32> to vector<8x32xf32>
    %110 = vector.extract_strided_slice %105 {offsets = [0, 64], sizes = [8, 32], strides = [1, 1]} : vector<8x96xf32> to vector<8x32xf32>
    %111 = arith.mulf %109, %85 : vector<8x32xf32>
    %112 = arith.mulf %108, %107 : vector<8x32xf32>
    %113 = arith.addf %111, %112 : vector<8x32xf32>
    %114 = math.tanh %113 : vector<8x32xf32>
    %115 = arith.mulf %110, %114 : vector<8x32xf32>
    %116 = arith.index_cast %95 : i32 to index
    %c0_32 = arith.constant 0 : index
    %117 = vector.load %arg2[%116, %c0_32] : memref<64x1xf32, #tpu.memory_space<vmem>>, vector<8x1xf32>
    %118 = vector.broadcast %117 : vector<8x1xf32> to vector<8x32xf32>
    %119 = arith.mulf %115, %118 : vector<8x32xf32>
    %120 = arith.index_cast %95 : i32 to index
    %c0_33 = arith.constant 0 : index
    %121 = vector.load %arg10[%120, %c0_33] : memref<64x32xf32, #tpu.memory_space<vmem>>, vector<8x32xf32>
    tpu.vector_store %arg10[%120, %c0_33], %119 {strides = array<i32>} : memref<64x32xf32, #tpu.memory_space<vmem>>, vector<8x32xf32>,
    %c4_i32 = arith.constant 4 : i32
    %c8_i32_34 = arith.constant 8 : i32
    %122 = arith.muli %c4_i32, %c8_i32_34 : i32
    %123 = tpu.assume_multiple %122, 8 : i32
    %124 = arith.index_cast %123 : i32 to index
    %c0_35 = arith.constant 0 : index
    %125 = vector.load %arg9[%124, %c0_35] : memref<64x128xf32, #tpu.memory_space<vmem>>, vector<8x128xf32>
    %cst_36 = arith.constant dense<0.000000e+00> : vector<8x128xf32>
    %126 = tpu.matmul %115, %7, %cst_36 {dimension_numbers = #tpu.dot_dimension_numbers<[1], [0], [0], [1], [0, 0, 1, 1], [], []>} : vector<8x32xf32>, vector<32x128xf32>, vector<8x128xf32> -> vector<8x128xf32>
    %127 = arith.addf %125, %126 : vector<8x128xf32>
    %128 = vector.extract_strided_slice %127 {offsets = [0, 0], sizes = [8, 96], strides = [1, 1]} : vector<8x128xf32> to vector<8x96xf32>
    %129 = arith.negf %128 : vector<8x96xf32>
    %130 = math.exp %129 : vector<8x96xf32>
    %cst_37 = arith.constant 1.000000e+00 : f32
    %131 = vector.broadcast %cst_37 : f32 to vector<8x96xf32>
    %132 = arith.addf %131, %130 : vector<8x96xf32>
    %133 = arith.divf %131, %132 : vector<8x96xf32>
    %134 = vector.extract_strided_slice %127 {offsets = [0, 96], sizes = [8, 32], strides = [1, 1]} : vector<8x128xf32> to vector<8x32xf32>
    %135 = math.tanh %134 : vector<8x32xf32>
    %136 = vector.extract_strided_slice %133 {offsets = [0, 0], sizes = [8, 32], strides = [1, 1]} : vector<8x96xf32> to vector<8x32xf32>
    %137 = vector.extract_strided_slice %133 {offsets = [0, 32], sizes = [8, 32], strides = [1, 1]} : vector<8x96xf32> to vector<8x32xf32>
    %138 = vector.extract_strided_slice %133 {offsets = [0, 64], sizes = [8, 32], strides = [1, 1]} : vector<8x96xf32> to vector<8x32xf32>
    %139 = arith.mulf %137, %113 : vector<8x32xf32>
    %140 = arith.mulf %136, %135 : vector<8x32xf32>
    %141 = arith.addf %139, %140 : vector<8x32xf32>
    %142 = math.tanh %141 : vector<8x32xf32>
    %143 = arith.mulf %138, %142 : vector<8x32xf32>
    %144 = arith.index_cast %123 : i32 to index
    %c0_38 = arith.constant 0 : index
    %145 = vector.load %arg2[%144, %c0_38] : memref<64x1xf32, #tpu.memory_space<vmem>>, vector<8x1xf32>
    %146 = vector.broadcast %145 : vector<8x1xf32> to vector<8x32xf32>
    %147 = arith.mulf %143, %146 : vector<8x32xf32>
    %148 = arith.index_cast %123 : i32 to index
    %c0_39 = arith.constant 0 : index
    %149 = vector.load %arg10[%148, %c0_39] : memref<64x32xf32, #tpu.memory_space<vmem>>, vector<8x32xf32>
    tpu.vector_store %arg10[%148, %c0_39], %147 {strides = array<i32>} : memref<64x32xf32, #tpu.memory_space<vmem>>, vector<8x32xf32>,
    %c5_i32 = arith.constant 5 : i32
    %c8_i32_40 = arith.constant 8 : i32
    %150 = arith.muli %c5_i32, %c8_i32_40 : i32
    %151 = tpu.assume_multiple %150, 8 : i32
    %152 = arith.index_cast %151 : i32 to index
    %c0_41 = arith.constant 0 : index
    %153 = vector.load %arg9[%152, %c0_41] : memref<64x128xf32, #tpu.memory_space<vmem>>, vector<8x128xf32>
    %cst_42 = arith.constant dense<0.000000e+00> : vector<8x128xf32>
    %154 = tpu.matmul %143, %7, %cst_42 {dimension_numbers = #tpu.dot_dimension_numbers<[1], [0], [0], [1], [0, 0, 1, 1], [], []>} : vector<8x32xf32>, vector<32x128xf32>, vector<8x128xf32> -> vector<8x128xf32>
    %155 = arith.addf %153, %154 : vector<8x128xf32>
    %156 = vector.extract_strided_slice %155 {offsets = [0, 0], sizes = [8, 96], strides = [1, 1]} : vector<8x128xf32> to vector<8x96xf32>
    %157 = arith.negf %156 : vector<8x96xf32>
    %158 = math.exp %157 : vector<8x96xf32>
    %cst_43 = arith.constant 1.000000e+00 : f32
    %159 = vector.broadcast %cst_43 : f32 to vector<8x96xf32>
    %160 = arith.addf %159, %158 : vector<8x96xf32>
    %161 = arith.divf %159, %160 : vector<8x96xf32>
    %162 = vector.extract_strided_slice %155 {offsets = [0, 96], sizes = [8, 32], strides = [1, 1]} : vector<8x128xf32> to vector<8x32xf32>
    %163 = math.tanh %162 : vector<8x32xf32>
    %164 = vector.extract_strided_slice %161 {offsets = [0, 0], sizes = [8, 32], strides = [1, 1]} : vector<8x96xf32> to vector<8x32xf32>
    %165 = vector.extract_strided_slice %161 {offsets = [0, 32], sizes = [8, 32], strides = [1, 1]} : vector<8x96xf32> to vector<8x32xf32>
    %166 = vector.extract_strided_slice %161 {offsets = [0, 64], sizes = [8, 32], strides = [1, 1]} : vector<8x96xf32> to vector<8x32xf32>
    %167 = arith.mulf %165, %141 : vector<8x32xf32>
    %168 = arith.mulf %164, %163 : vector<8x32xf32>
    %169 = arith.addf %167, %168 : vector<8x32xf32>
    %170 = math.tanh %169 : vector<8x32xf32>
    %171 = arith.mulf %166, %170 : vector<8x32xf32>
    %172 = arith.index_cast %151 : i32 to index
    %c0_44 = arith.constant 0 : index
    %173 = vector.load %arg2[%172, %c0_44] : memref<64x1xf32, #tpu.memory_space<vmem>>, vector<8x1xf32>
    %174 = vector.broadcast %173 : vector<8x1xf32> to vector<8x32xf32>
    %175 = arith.mulf %171, %174 : vector<8x32xf32>
    %176 = arith.index_cast %151 : i32 to index
    %c0_45 = arith.constant 0 : index
    %177 = vector.load %arg10[%176, %c0_45] : memref<64x32xf32, #tpu.memory_space<vmem>>, vector<8x32xf32>
    tpu.vector_store %arg10[%176, %c0_45], %175 {strides = array<i32>} : memref<64x32xf32, #tpu.memory_space<vmem>>, vector<8x32xf32>,
    %c6_i32 = arith.constant 6 : i32
    %c8_i32_46 = arith.constant 8 : i32
    %178 = arith.muli %c6_i32, %c8_i32_46 : i32
    %179 = tpu.assume_multiple %178, 8 : i32
    %180 = arith.index_cast %179 : i32 to index
    %c0_47 = arith.constant 0 : index
    %181 = vector.load %arg9[%180, %c0_47] : memref<64x128xf32, #tpu.memory_space<vmem>>, vector<8x128xf32>
    %cst_48 = arith.constant dense<0.000000e+00> : vector<8x128xf32>
    %182 = tpu.matmul %171, %7, %cst_48 {dimension_numbers = #tpu.dot_dimension_numbers<[1], [0], [0], [1], [0, 0, 1, 1], [], []>} : vector<8x32xf32>, vector<32x128xf32>, vector<8x128xf32> -> vector<8x128xf32>
    %183 = arith.addf %181, %182 : vector<8x128xf32>
    %184 = vector.extract_strided_slice %183 {offsets = [0, 0], sizes = [8, 96], strides = [1, 1]} : vector<8x128xf32> to vector<8x96xf32>
    %185 = arith.negf %184 : vector<8x96xf32>
    %186 = math.exp %185 : vector<8x96xf32>
    %cst_49 = arith.constant 1.000000e+00 : f32
    %187 = vector.broadcast %cst_49 : f32 to vector<8x96xf32>
    %188 = arith.addf %187, %186 : vector<8x96xf32>
    %189 = arith.divf %187, %188 : vector<8x96xf32>
    %190 = vector.extract_strided_slice %183 {offsets = [0, 96], sizes = [8, 32], strides = [1, 1]} : vector<8x128xf32> to vector<8x32xf32>
    %191 = math.tanh %190 : vector<8x32xf32>
    %192 = vector.extract_strided_slice %189 {offsets = [0, 0], sizes = [8, 32], strides = [1, 1]} : vector<8x96xf32> to vector<8x32xf32>
    %193 = vector.extract_strided_slice %189 {offsets = [0, 32], sizes = [8, 32], strides = [1, 1]} : vector<8x96xf32> to vector<8x32xf32>
    %194 = vector.extract_strided_slice %189 {offsets = [0, 64], sizes = [8, 32], strides = [1, 1]} : vector<8x96xf32> to vector<8x32xf32>
    %195 = arith.mulf %193, %169 : vector<8x32xf32>
    %196 = arith.mulf %192, %191 : vector<8x32xf32>
    %197 = arith.addf %195, %196 : vector<8x32xf32>
    %198 = math.tanh %197 : vector<8x32xf32>
    %199 = arith.mulf %194, %198 : vector<8x32xf32>
    %200 = arith.index_cast %179 : i32 to index
    %c0_50 = arith.constant 0 : index
    %201 = vector.load %arg2[%200, %c0_50] : memref<64x1xf32, #tpu.memory_space<vmem>>, vector<8x1xf32>
    %202 = vector.broadcast %201 : vector<8x1xf32> to vector<8x32xf32>
    %203 = arith.mulf %199, %202 : vector<8x32xf32>
    %204 = arith.index_cast %179 : i32 to index
    %c0_51 = arith.constant 0 : index
    %205 = vector.load %arg10[%204, %c0_51] : memref<64x32xf32, #tpu.memory_space<vmem>>, vector<8x32xf32>
    tpu.vector_store %arg10[%204, %c0_51], %203 {strides = array<i32>} : memref<64x32xf32, #tpu.memory_space<vmem>>, vector<8x32xf32>,
    %c7_i32 = arith.constant 7 : i32
    %c8_i32_52 = arith.constant 8 : i32
    %206 = arith.muli %c7_i32, %c8_i32_52 : i32
    %207 = tpu.assume_multiple %206, 8 : i32
    %208 = arith.index_cast %207 : i32 to index
    %c0_53 = arith.constant 0 : index
    %209 = vector.load %arg9[%208, %c0_53] : memref<64x128xf32, #tpu.memory_space<vmem>>, vector<8x128xf32>
    %cst_54 = arith.constant dense<0.000000e+00> : vector<8x128xf32>
    %210 = tpu.matmul %199, %7, %cst_54 {dimension_numbers = #tpu.dot_dimension_numbers<[1], [0], [0], [1], [0, 0, 1, 1], [], []>} : vector<8x32xf32>, vector<32x128xf32>, vector<8x128xf32> -> vector<8x128xf32>
    %211 = arith.addf %209, %210 : vector<8x128xf32>
    %212 = vector.extract_strided_slice %211 {offsets = [0, 0], sizes = [8, 96], strides = [1, 1]} : vector<8x128xf32> to vector<8x96xf32>
    %213 = arith.negf %212 : vector<8x96xf32>
    %214 = math.exp %213 : vector<8x96xf32>
    %cst_55 = arith.constant 1.000000e+00 : f32
    %215 = vector.broadcast %cst_55 : f32 to vector<8x96xf32>
    %216 = arith.addf %215, %214 : vector<8x96xf32>
    %217 = arith.divf %215, %216 : vector<8x96xf32>
    %218 = vector.extract_strided_slice %211 {offsets = [0, 96], sizes = [8, 32], strides = [1, 1]} : vector<8x128xf32> to vector<8x32xf32>
    %219 = math.tanh %218 : vector<8x32xf32>
    %220 = vector.extract_strided_slice %217 {offsets = [0, 0], sizes = [8, 32], strides = [1, 1]} : vector<8x96xf32> to vector<8x32xf32>
    %221 = vector.extract_strided_slice %217 {offsets = [0, 32], sizes = [8, 32], strides = [1, 1]} : vector<8x96xf32> to vector<8x32xf32>
    %222 = vector.extract_strided_slice %217 {offsets = [0, 64], sizes = [8, 32], strides = [1, 1]} : vector<8x96xf32> to vector<8x32xf32>
    %223 = arith.mulf %221, %197 : vector<8x32xf32>
    %224 = arith.mulf %220, %219 : vector<8x32xf32>
    %225 = arith.addf %223, %224 : vector<8x32xf32>
    %226 = math.tanh %225 : vector<8x32xf32>
    %227 = arith.mulf %222, %226 : vector<8x32xf32>
    %228 = arith.index_cast %207 : i32 to index
    %c0_56 = arith.constant 0 : index
    %229 = vector.load %arg2[%228, %c0_56] : memref<64x1xf32, #tpu.memory_space<vmem>>, vector<8x1xf32>
    %230 = vector.broadcast %229 : vector<8x1xf32> to vector<8x32xf32>
    %231 = arith.mulf %227, %230 : vector<8x32xf32>
    %232 = arith.index_cast %207 : i32 to index
    %c0_57 = arith.constant 0 : index
    %233 = vector.load %arg10[%232, %c0_57] : memref<64x32xf32, #tpu.memory_space<vmem>>, vector<8x32xf32>
    tpu.vector_store %arg10[%232, %c0_57], %231 {strides = array<i32>} : memref<64x32xf32, #tpu.memory_space<vmem>>, vector<8x32xf32>,
    %c8_i32_58 = arith.constant 8 : i32
    %c0_59 = arith.constant 0 : index
    %c0_60 = arith.constant 0 : index
    %234 = vector.load %arg10[%c0_59, %c0_60] : memref<64x32xf32, #tpu.memory_space<vmem>>, vector<64x32xf32>
    %c0_61 = arith.constant 0 : index
    %c0_62 = arith.constant 0 : index
    %235 = vector.load %arg6[%c0_61, %c0_62] : memref<32x128xf32, #tpu.memory_space<vmem>>, vector<32x128xf32>
    %cst_63 = arith.constant dense<0.000000e+00> : vector<64x128xf32>
    %236 = tpu.matmul %234, %235, %cst_63 {dimension_numbers = #tpu.dot_dimension_numbers<[1], [0], [0], [1], [0, 0, 1, 1], [], []>} : vector<64x32xf32>, vector<32x128xf32>, vector<64x128xf32> -> vector<64x128xf32>
    %c0_64 = arith.constant 0 : index
    %c0_65 = arith.constant 0 : index
    %237 = vector.load %arg7[%c0_64, %c0_65] : memref<1x128xf32, #tpu.memory_space<vmem>>, vector<1x128xf32>
    %238 = vector.broadcast %237 : vector<1x128xf32> to vector<64x128xf32>
    %239 = arith.addf %236, %238 : vector<64x128xf32>
    %240 = math.tanh %239 : vector<64x128xf32>
    %c0_66 = arith.constant 0 : index
    %c0_67 = arith.constant 0 : index
    %241 = vector.load %arg8[%c0_66, %c0_67] : memref<64x128xf32, #tpu.memory_space<vmem>>, vector<64x128xf32>
    tpu.vector_store %arg8[%c0_66, %c0_67], %240 {strides = array<i32>} : memref<64x128xf32, #tpu.memory_space<vmem>>, vector<64x128xf32>,
    return
  }
  func.func @transform_0(%arg0: i32) -> (i32, i32) {
    %c0_i32 = arith.constant 0 : i32
    %c0_i32_0 = arith.constant 0 : i32
    %c0_i32_1 = arith.constant 0 : i32
    return %c0_i32, %c0_i32_0 : i32, i32
  }
  func.func @transform_1(%arg0: i32) -> (i32, i32) {
    %c0_i32 = arith.constant 0 : i32
    %c0_i32_0 = arith.constant 0 : i32
    %c0_i32_1 = arith.constant 0 : i32
    return %c0_i32, %c0_i32_0 : i32, i32
  }
  func.func @transform_2(%arg0: i32) -> (i32, i32) {
    %c0_i32 = arith.constant 0 : i32
    %c0_i32_0 = arith.constant 0 : i32
    %c0_i32_1 = arith.constant 0 : i32
    return %c0_i32, %c0_i32_0 : i32, i32
  }
  func.func @transform_3(%arg0: i32) -> (i32, i32) {
    %c0_i32 = arith.constant 0 : i32
    %c0_i32_0 = arith.constant 0 : i32
    %c0_i32_1 = arith.constant 0 : i32
    return %c0_i32, %c0_i32_0 : i32, i32
  }
  func.func @transform_4(%arg0: i32) -> (i32, i32) {
    %c0_i32 = arith.constant 0 : i32
    %c0_i32_0 = arith.constant 0 : i32
    %c0_i32_1 = arith.constant 0 : i32
    return %c0_i32, %c0_i32_0 : i32, i32
  }
  func.func @transform_5(%arg0: i32) -> (i32, i32) {
    %c0_i32 = arith.constant 0 : i32
    %c0_i32_0 = arith.constant 0 : i32
    %c0_i32_1 = arith.constant 0 : i32
    return %c0_i32, %c0_i32_0 : i32, i32
  }
  func.func @transform_6(%arg0: i32) -> (i32, i32) {
    %c0_i32 = arith.constant 0 : i32
    %c0_i32_0 = arith.constant 0 : i32
    %c0_i32_1 = arith.constant 0 : i32
    return %c0_i32, %c0_i32_0 : i32, i32
  }
  func.func @transform_7(%arg0: i32) -> (i32, i32) {
    %c0_i32 = arith.constant 0 : i32
    %c0_i32_0 = arith.constant 0 : i32
    %c0_i32_1 = arith.constant 0 : i32
    return %c0_i32, %c0_i32_0 : i32, i32
  }
}

</mosaic_0001>

<llo_original>
// kernel: tpu_custom_call.1
$region0: #{tpu_custom_call.1}
  #allocation0 [shape = 'u32[]', space=smem, size = 0x4, offset = 0x4, fixed_abs, tag = 'smem constant byte address 0x4 - core index']
  #allocation1 [shape = 'u32[144,128]{1,0:T(1,128)}', space=vmem, size = 0x12000, scoped, tag = 'internal scratch']
  #allocation2 [shape = 'f32[64,128]{1,0:T(8,128)}', space=vmem, size = 0x8000, scoped, tag = 'scratch operand']
  #allocation3 [shape = 'f32[64,32]{1,0:T(8,128)}', space=vmem, size = 0x8000, scoped, tag = 'scratch operand']
  %s0 = inlined_call_operand.vmem [shape: f32[64,16], index: 0, kind: input, shape index: {}]
  %s1 = inlined_call_operand.vmem [shape: f32[64,1], index: 1, kind: input, shape index: {}]
  %s2 = inlined_call_operand.vmem [shape: f32[16,128], index: 2, kind: input, shape index: {}]
  %s3 = inlined_call_operand.vmem [shape: f32[32,128], index: 3, kind: input, shape index: {}]
  %s4 = inlined_call_operand.vmem [shape: f32[1,128], index: 4, kind: input, shape index: {}]
  %s5 = inlined_call_operand.vmem [shape: f32[32,128], index: 5, kind: input, shape index: {}]
  %s6 = inlined_call_operand.vmem [shape: f32[1,128], index: 6, kind: input, shape index: {}]
  %s7 = inlined_call_operand.hbm [shape: f32[64,128], index: 7, kind: output, shape index: {}]
  %s8 = sld [smem:[#allocation0]]
  $region38: #{tpu_custom_call.1} parent=0
    _
  %s10 = ssub.s32 1, %s8
  %s11 = scalar_select 0, %s10, %s8
  $region1: #{tpu_custom_call.1} parent=0
    #allocation4 [shape = 'u8[32768]{0}', space=vmem, size = 0x8000, scoped, tag = 'output window, operand 0, single buffered']
    #allocation5 [shape = 's32[1]{0}', space=sflag, size = 0x4, scoped, tag = 'scoped memory for tpu_custom_call.1']
    %12 = vsyncpa [#allocation5], 0
    // Predicated region
    $region2: #{tpu_custom_call.1} parent=1 // pred_check
      _
    $region3: #{tpu_custom_call.1} parent=1 // pred_check_branch
      %14 = sbr.rel (0) target = $region5
    $region4: #{tpu_custom_call.1} parent=1 // pred_region
      _
    $region5: #{tpu_custom_call.1} parent=1 // pred_fallthru
      _
    // Predicated region
    $region6: #{tpu_custom_call.1} parent=1 // pred_check
      _
    $region7: #{tpu_custom_call.1} parent=1 // pred_check_branch
      %16 = sbr.rel (0) target = $region9
    $region8: #{tpu_custom_call.1} parent=1 // pred_region
      _
    $region9: #{tpu_custom_call.1} parent=1 // pred_fallthru
      _
    // Predicated region
    $region10: #{tpu_custom_call.1} parent=1 // pred_check
      _
    $region11: #{tpu_custom_call.1} parent=1 // pred_check_branch
      %18 = sbr.rel (0) target = $region13
    $region12: #{tpu_custom_call.1} parent=1 // pred_region
      _
    $region13: #{tpu_custom_call.1} parent=1 // pred_fallthru
      _
    // Predicated region
    $region14: #{tpu_custom_call.1} parent=1 // pred_check
      _
    $region15: #{tpu_custom_call.1} parent=1 // pred_check_branch
      %20 = sbr.rel (0) target = $region17
    $region16: #{tpu_custom_call.1} parent=1 // pred_region
      _
    $region17: #{tpu_custom_call.1} parent=1 // pred_fallthru
      _
    // Predicated region
    $region18: #{tpu_custom_call.1} parent=1 // pred_check
      _
    $region19: #{tpu_custom_call.1} parent=1 // pred_check_branch
      %22 = sbr.rel (0) target = $region21
    $region20: #{tpu_custom_call.1} parent=1 // pred_region
      _
    $region21: #{tpu_custom_call.1} parent=1 // pred_fallthru
      _
    // Predicated region
    $region22: #{tpu_custom_call.1} parent=1 // pred_check
      _
    $region23: #{tpu_custom_call.1} parent=1 // pred_check_branch
      %24 = sbr.rel (0) target = $region25
    $region24: #{tpu_custom_call.1} parent=1 // pred_region
      _
    $region25: #{tpu_custom_call.1} parent=1 // pred_fallthru
      _
    // Predicated region
    $region26: #{tpu_custom_call.1} parent=1 // pred_check
      _
    $region27: #{tpu_custom_call.1} parent=1 // pred_check_branch
      %26 = sbr.rel (0) target = $region29
    $region28: #{tpu_custom_call.1} parent=1 // pred_region
      _
    $region29: #{tpu_custom_call.1} parent=1 // pred_fallthru
      _
    %v27 = vld [vmem:[%s0] sm:$0xff]
    %v28 = vld [vmem:[%s0 + $0x8] sm:$0xff]
    %v29 = vld [vmem:[%s0 + $0x10] sm:$0xff]
    %v30 = vld [vmem:[%s0 + $0x18] sm:$0xff]
    %v31 = vld [vmem:[%s0 + $0x20] sm:$0xff]
    %v32 = vld [vmem:[%s0 + $0x28] sm:$0xff]
    %v33 = vld [vmem:[%s0 + $0x30] sm:$0xff]
    %v34 = vld [vmem:[%s0 + $0x38] sm:$0xff]
    %v35 = vld [vmem:[%s2] sm:$0xff]
    %v36 = vld [vmem:[%s2 + $0x8] sm:$0xff]
    %v37 = vld [vmem:[%s4] sm:$0x1]
    %v39 = vlaneseq
    %v40 = vshrl.u32 %v39, 7
    %v41 = vsub.s32 0, %v40
    %v42 = vrot.slane %v37, %v41
    %vm44 = vcmask 130048
    %v46 = vsel %vm44, %v27, 0
    %v49 = vsel %vm44, %v28, 0
    %v52 = vsel %vm44, %v29, 0
    %v55 = vsel %vm44, %v30, 0
    %v58 = vsel %vm44, %v31, 0
    %v61 = vsel %vm44, %v32, 0
    %v64 = vsel %vm44, %v33, 0
    %v67 = vsel %vm44, %v34, 0
    %69 = vmatprep.subr.mxu0 0.0
    %70 = vmatpush1.msra.mxu0 %v35
    %71 = vmatprep.subr.mxu0 0.0
    %72 = vmatpush1.msra.mxu0 %v36
    %73 = vmatprep.subr.mxu0 0.0
    %74 = vmatpush1.msra.mxu0 0.0
    %75 = vmatprep.subr.mxu0 0.0
    %76 = vmatpush1.msra.mxu0 0.0
    %77 = vmatprep.subr.mxu0 0.0
    %78 = vmatpush1.msra.mxu0 0.0
    %79 = vmatprep.subr.mxu0 0.0
    %80 = vmatpush1.msra.mxu0 0.0
    %81 = vmatprep.subr.mxu0 0.0
    %82 = vmatpush1.msra.mxu0 0.0
    %83 = vmatprep.subr.mxu0 0.0
    %84 = vmatpush1.msra.mxu0 0.0
    %85 = vmatprep.subr.mxu0 0.0
    %86 = vmatpush1.msra.mxu0 0.0
    %87 = vmatprep.subr.mxu0 0.0
    %88 = vmatpush1.msra.mxu0 0.0
    %89 = vmatprep.subr.mxu0 0.0
    %90 = vmatpush1.msra.mxu0 0.0
    %91 = vmatprep.subr.mxu0 0.0
    %92 = vmatpush1.msra.mxu0 0.0
    %93 = vmatprep.subr.mxu0 0.0
    %94 = vmatpush1.msra.mxu0 0.0
    %95 = vmatprep.subr.mxu0 0.0
    %96 = vmatpush1.msra.mxu0 0.0
    %97 = vmatprep.subr.mxu0 0.0
    %98 = vmatpush1.msra.mxu0 0.0
    %99 = vmatprep.subr.mxu0 0.0
    %100 = vmatpush1.msra.mxu0 0.0
    %101 = vmatprep.subr.mxu0 0.0
    %102 = vmatpush1.msra.mxu0 0.0
    %103 = vmatprep.subr.mxu0 0.0
    %104 = vmatpush1.msra.mxu0 0.0
    %105 = vmatprep.subr.mxu0 0.0
    %106 = vmatpush1.msra.mxu0 0.0
    %107 = vmatprep.subr.mxu0 0.0
    %108 = vmatpush1.msra.mxu0 0.0
    %109 = vmatprep.subr.mxu0 0.0
    %110 = vmatpush1.msra.mxu0 0.0
    %111 = vmatprep.subr.mxu0 0.0
    %112 = vmatpush1.msra.mxu0 0.0
    %113 = vmatprep.subr.mxu0 0.0
    %114 = vmatpush1.msra.mxu0 0.0
    %115 = vmatprep.subr.mxu0 0.0
    %116 = vmatpush1.msra.mxu0 0.0
    %117 = vmatprep.subr.mxu0 0.0
    %118 = vmatpush1.msra.mxu0 0.0
    %119 = vmatprep.subr.mxu0 0.0
    %120 = vmatpush1.msra.mxu0 0.0
    %121 = vmatprep.subr.mxu0 0.0
    %122 = vmatpush1.msra.mxu0 0.0
    %123 = vmatprep.subr.mxu0 0.0
    %124 = vmatpush1.msra.mxu0 0.0
    %125 = vmatprep.subr.mxu0 0.0
    %126 = vmatpush1.msra.mxu0 0.0
    %127 = vmatprep.subr.mxu0 0.0
    %128 = vmatpush1.msra.mxu0 0.0
    %129 = vmatprep.subr.mxu0 0.0
    %130 = vmatpush1.msra.mxu0 0.0
    %131 = vmatprep.subr.mxu0 0.0
    %132 = vmatpush1.msra.mxu0 0.0
    %133 = vmatprep.mubr.f32.mxu0 0.0
    %134 = vmatmul.mubr.f32.gmra.mrb[0].mxu0 %v46
    %v135 = vpop.f32.mrb[0].mxu0
    %v136 = vadd.f32 %v42, %v135
    %v137 = vpop.f32.mrb[0].mxu0
    %138 = vmatprep.mubr.f32.mxu0 0.0
    %139 = vmatmul.mubr.f32.gmra.mrb[0].mxu0 %v49
    %v140 = vpop.f32.mrb[0].mxu0
    %v141 = vadd.f32 %v42, %v140
    %v142 = vpop.f32.mrb[0].mxu0
    %143 = vmatprep.mubr.f32.mxu0 0.0
    %144 = vmatmul.mubr.f32.gmra.mrb[0].mxu0 %v52
    %v145 = vpop.f32.mrb[0].mxu0
    %v146 = vadd.f32 %v42, %v145
    %v147 = vpop.f32.mrb[0].mxu0
    %148 = vmatprep.mubr.f32.mxu0 0.0
    %149 = vmatmul.mubr.f32.gmra.mrb[0].mxu0 %v55
    %v150 = vpop.f32.mrb[0].mxu0
    %v151 = vadd.f32 %v42, %v150
    %v152 = vpop.f32.mrb[0].mxu0
    %153 = vmatprep.mubr.f32.mxu0 0.0
    %154 = vmatmul.mubr.f32.gmra.mrb[0].mxu0 %v58
    %v155 = vpop.f32.mrb[0].mxu0
    %v156 = vadd.f32 %v42, %v155
    %v157 = vpop.f32.mrb[0].mxu0
    %158 = vmatprep.mubr.f32.mxu0 0.0
    %159 = vmatmul.mubr.f32.gmra.mrb[0].mxu0 %v61
    %v160 = vpop.f32.mrb[0].mxu0
    %v161 = vadd.f32 %v42, %v160
    %v162 = vpop.f32.mrb[0].mxu0
    %163 = vmatprep.mubr.f32.mxu0 0.0
    %164 = vmatmul.mubr.f32.gmra.mrb[0].mxu0 %v64
    %v165 = vpop.f32.mrb[0].mxu0
    %v166 = vadd.f32 %v42, %v165
    %v167 = vpop.f32.mrb[0].mxu0
    %168 = vmatprep.mubr.f32.mxu0 0.0
    %169 = vmatmul.mubr.f32.gmra.mrb[0].mxu0 %v67
    %v170 = vpop.f32.mrb[0].mxu0
    %v171 = vadd.f32 %v42, %v170
    %v172 = vpop.f32.mrb[0].mxu0
    %173 = vdwg.mxu0
    %174 = vst [vmem:[#allocation2] sm:$0xff] %v136
    %175 = vst [vmem:[#allocation2 + $0x8] sm:$0xff] %v141
    %176 = vst [vmem:[#allocation2 + $0x10] sm:$0xff] %v146
    %177 = vst [vmem:[#allocation2 + $0x18] sm:$0xff] %v151
    %178 = vst [vmem:[#allocation2 + $0x20] sm:$0xff] %v156
    %179 = vst [vmem:[#allocation2 + $0x28] sm:$0xff] %v161
    %180 = vst [vmem:[#allocation2 + $0x30] sm:$0xff] %v166
    %181 = vst [vmem:[#allocation2 + $0x38] sm:$0xff] %v171
    %v182 = vld [vmem:[%s3] sm:$0xff]
    %v183 = vld [vmem:[%s3 + $0x8] sm:$0xff]
    %v184 = vld [vmem:[%s3 + $0x10] sm:$0xff]
    %v185 = vld [vmem:[%s3 + $0x18] sm:$0xff]
    %v186 = vld [vmem:[#allocation2] sm:$0xff]
    %vm187 = vcmask 261120
    %v189 = vsel %vm187, 0.0, 0
    %191 = vmatprep.subr.mxu0 0.0
    %192 = vmatpush1.msra.mxu0 %v182
    %193 = vmatprep.subr.mxu0 0.0
    %194 = vmatpush1.msra.mxu0 %v183
    %195 = vmatprep.subr.mxu0 0.0
    %196 = vmatpush1.msra.mxu0 %v184
    %197 = vmatprep.subr.mxu0 0.0
    %198 = vmatpush1.msra.mxu0 %v185
    %199 = vmatprep.subr.mxu0 0.0
    %200 = vmatpush1.msra.mxu0 0.0
    %201 = vmatprep.subr.mxu0 0.0
    %202 = vmatpush1.msra.mxu0 0.0
    %203 = vmatprep.subr.mxu0 0.0
    %204 = vmatpush1.msra.mxu0 0.0
    %205 = vmatprep.subr.mxu0 0.0
    %206 = vmatpush1.msra.mxu0 0.0
    %207 = vmatprep.subr.mxu0 0.0
    %208 = vmatpush1.msra.mxu0 0.0
    %209 = vmatprep.subr.mxu0 0.0
    %210 = vmatpush1.msra.mxu0 0.0
    %211 = vmatprep.subr.mxu0 0.0
    %212 = vmatpush1.msra.mxu0 0.0
    %213 = vmatprep.subr.mxu0 0.0
    %214 = vmatpush1.msra.mxu0 0.0
    %215 = vmatprep.subr.mxu0 0.0
    %216 = vmatpush1.msra.mxu0 0.0
    %217 = vmatprep.subr.mxu0 0.0
    %218 = vmatpush1.msra.mxu0 0.0
    %219 = vmatprep.subr.mxu0 0.0
    %220 = vmatpush1.msra.mxu0 0.0
    %221 = vmatprep.subr.mxu0 0.0
    %222 = vmatpush1.msra.mxu0 0.0
    %223 = vmatprep.subr.mxu0 0.0
    %224 = vmatpush1.msra.mxu0 0.0
    %225 = vmatprep.subr.mxu0 0.0
    %226 = vmatpush1.msra.mxu0 0.0
    %227 = vmatprep.subr.mxu0 0.0
    %228 = vmatpush1.msra.mxu0 0.0
    %229 = vmatprep.subr.mxu0 0.0
    %230 = vmatpush1.msra.mxu0 0.0
    %231 = vmatprep.subr.mxu0 0.0
    %232 = vmatpush1.msra.mxu0 0.0
    %233 = vmatprep.subr.mxu0 0.0
    %234 = vmatpush1.msra.mxu0 0.0
    %235 = vmatprep.subr.mxu0 0.0
    %236 = vmatpush1.msra.mxu0 0.0
    %237 = vmatprep.subr.mxu0 0.0
    %238 = vmatpush1.msra.mxu0 0.0
    %239 = vmatprep.subr.mxu0 0.0
    %240 = vmatpush1.msra.mxu0 0.0
    %241 = vmatprep.subr.mxu0 0.0
    %242 = vmatpush1.msra.mxu0 0.0
    %243 = vmatprep.subr.mxu0 0.0
    %244 = vmatpush1.msra.mxu0 0.0
    %245 = vmatprep.subr.mxu0 0.0
    %246 = vmatpush1.msra.mxu0 0.0
    %247 = vmatprep.subr.mxu0 0.0
    %248 = vmatpush1.msra.mxu0 0.0
    %249 = vmatprep.subr.mxu0 0.0
    %250 = vmatpush1.msra.mxu0 0.0
    %251 = vmatprep.subr.mxu0 0.0
    %252 = vmatpush1.msra.mxu0 0.0
    %253 = vmatprep.subr.mxu0 0.0
    %254 = vmatpush1.msra.mxu0 0.0
    %255 = vmatprep.mubr.f32.mxu0 0.0
    %256 = vmatmul.mubr.f32.gmra.mrb[0].mxu0 %v189
    %v257 = vpop.f32.mrb[0].mxu0
    %v258 = vadd.f32 0.0, %v257
    %v259 = vpop.f32.mrb[0].mxu0
    %260 = vdwg.mxu0
    %v261 = vadd.f32 %v186, %v258
    %v262 = vxor.u32 %v261, 2147483648
    %v263 = vmul.f32 %v262, 1.442695
    %v264 = vpow.pop %v263
    %v265 = vadd.f32 %v264, 1.0
    %v266 = vrcp.pop %v265
    %v267 = vmul.f32 1.0, %v266
    %v268 = vtanh.pop %v261
    %v269 = vmul.f32 %v267, 0.0
    %271 = vrot.lane.b32.xlu0 %v268, 32
    %v272 = vpop.permute.xlu0 %271
    %v274 = vmul.f32 %v267, %v272
    %276 = vrot.lane.b32.xlu0 %v274, 32
    %v277 = vpop.permute.xlu0 %276
    %v279 = vadd.f32 %v269, %v277
    %v280 = vtanh.pop %v279
    %282 = vrot.lane.b32.xlu0 %v280, 32
    %v283 = vpop.permute.xlu0 %282
    %v285 = vmul.f32 %v267, %v283
    %v286 = vld [vmem:[%s1] sm:$0xff]
    %288 = vset.pattern.permute.xlu0 0
    %289 = vperm.xlu0 %288, %v286
    %v290 = vpop.permute.xlu0 %289
    %v292 = vmul.f32 %v285, %v290
    %294 = vrot.lane.b32.xlu0 %v292, 64
    %v295 = vpop.permute.xlu0 %294
    %297 = vst.msk [vmem:[#allocation3] sm:$0xff] %vm187, %v295
    %s298 = scalar_lea.vmem [#allocation2], 8
    %v299 = vld [vmem:[%s298] sm:$0xff]
    %301 = vrot.lane.b32.xlu0 %v285, 64
    %v302 = vpop.permute.xlu0 %301
    %v303 = vsel %vm187, %v302, 0
    %305 = vmatprep.subr.mxu0 0.0
    %306 = vmatpush1.msra.mxu0 %v182
    %307 = vmatprep.subr.mxu0 0.0
    %308 = vmatpush1.msra.mxu0 %v183
    %309 = vmatprep.subr.mxu0 0.0
    %310 = vmatpush1.msra.mxu0 %v184
    %311 = vmatprep.subr.mxu0 0.0
    %312 = vmatpush1.msra.mxu0 %v185
    %313 = vmatprep.subr.mxu0 0.0
    %314 = vmatpush1.msra.mxu0 0.0
    %315 = vmatprep.subr.mxu0 0.0
    %316 = vmatpush1.msra.mxu0 0.0
    %317 = vmatprep.subr.mxu0 0.0
    %318 = vmatpush1.msra.mxu0 0.0
    %319 = vmatprep.subr.mxu0 0.0
    %320 = vmatpush1.msra.mxu0 0.0
    %321 = vmatprep.subr.mxu0 0.0
    %322 = vmatpush1.msra.mxu0 0.0
    %323 = vmatprep.subr.mxu0 0.0
    %324 = vmatpush1.msra.mxu0 0.0
    %325 = vmatprep.subr.mxu0 0.0
    %326 = vmatpush1.msra.mxu0 0.0
    %327 = vmatprep.subr.mxu0 0.0
    %328 = vmatpush1.msra.mxu0 0.0
    %329 = vmatprep.subr.mxu0 0.0
    %330 = vmatpush1.msra.mxu0 0.0
    %331 = vmatprep.subr.mxu0 0.0
    %332 = vmatpush1.msra.mxu0 0.0
    %333 = vmatprep.subr.mxu0 0.0
    %334 = vmatpush1.msra.mxu0 0.0
    %335 = vmatprep.subr.mxu0 0.0
    %336 = vmatpush1.msra.mxu0 0.0
    %337 = vmatprep.subr.mxu0 0.0
    %338 = vmatpush1.msra.mxu0 0.0
    %339 = vmatprep.subr.mxu0 0.0
    %340 = vmatpush1.msra.mxu0 0.0
    %341 = vmatprep.subr.mxu0 0.0
    %342 = vmatpush1.msra.mxu0 0.0
    %343 = vmatprep.subr.mxu0 0.0
    %344 = vmatpush1.msra.mxu0 0.0
    %345 = vmatprep.subr.mxu0 0.0
    %346 = vmatpush1.msra.mxu0 0.0
    %347 = vmatprep.subr.mxu0 0.0
    %348 = vmatpush1.msra.mxu0 0.0
    %349 = vmatprep.subr.mxu0 0.0
    %350 = vmatpush1.msra.mxu0 0.0
    %351 = vmatprep.subr.mxu0 0.0
    %352 = vmatpush1.msra.mxu0 0.0
    %353 = vmatprep.subr.mxu0 0.0
    %354 = vmatpush1.msra.mxu0 0.0
    %355 = vmatprep.subr.mxu0 0.0
    %356 = vmatpush1.msra.mxu0 0.0
    %357 = vmatprep.subr.mxu0 0.0
    %358 = vmatpush1.msra.mxu0 0.0
    %359 = vmatprep.subr.mxu0 0.0
    %360 = vmatpush1.msra.mxu0 0.0
    %361 = vmatprep.subr.mxu0 0.0
    %362 = vmatpush1.msra.mxu0 0.0
    %363 = vmatprep.subr.mxu0 0.0
    %364 = vmatpush1.msra.mxu0 0.0
    %365 = vmatprep.subr.mxu0 0.0
    %366 = vmatpush1.msra.mxu0 0.0
    %367 = vmatprep.subr.mxu0 0.0
    %368 = vmatpush1.msra.mxu0 0.0
    %369 = vmatprep.mubr.f32.mxu0 0.0
    %370 = vmatmul.mubr.f32.gmra.mrb[0].mxu0 %v303
    %v371 = vpop.f32.mrb[0].mxu0
    %v372 = vadd.f32 0.0, %v371
    %v373 = vpop.f32.mrb[0].mxu0
    %374 = vdwg.mxu0
    %v375 = vadd.f32 %v299, %v372
    %v376 = vxor.u32 %v375, 2147483648
    %v377 = vmul.f32 %v376, 1.442695
    %v378 = vpow.pop %v377
    %v379 = vadd.f32 %v378, 1.0
    %v380 = vrcp.pop %v379
    %v381 = vmul.f32 1.0, %v380
    %v382 = vtanh.pop %v375
    %v383 = vmul.f32 %v381, %v279
    %385 = vrot.lane.b32.xlu0 %v382, 32
    %v386 = vpop.permute.xlu0 %385
    %v388 = vmul.f32 %v381, %v386
    %390 = vrot.lane.b32.xlu0 %v388, 32
    %v391 = vpop.permute.xlu0 %390
    %v393 = vadd.f32 %v383, %v391
    %v394 = vtanh.pop %v393
    %396 = vrot.lane.b32.xlu0 %v394, 32
    %v397 = vpop.permute.xlu0 %396
    %v399 = vmul.f32 %v381, %v397
    %s400 = scalar_lea.vmem %s1, 8
    %v401 = vld [vmem:[%s400] sm:$0xff]
    %403 = vset.pattern.permute.xlu0 0
    %404 = vperm.xlu0 %403, %v401
    %v405 = vpop.permute.xlu0 %404
    %v407 = vmul.f32 %v399, %v405
    %409 = vrot.lane.b32.xlu0 %v407, 64
    %v410 = vpop.permute.xlu0 %409
    %s412 = scalar_lea.vmem [#allocation3], 8
    %413 = vst.msk [vmem:[%s412] sm:$0xff] %vm187, %v410
    %s414 = scalar_lea.vmem [#allocation2], 16
    %v415 = vld [vmem:[%s414] sm:$0xff]
    %417 = vrot.lane.b32.xlu0 %v399, 64
    %v418 = vpop.permute.xlu0 %417
    %v419 = vsel %vm187, %v418, 0
    %421 = vmatprep.subr.mxu0 0.0
    %422 = vmatpush1.msra.mxu0 %v182
    %423 = vmatprep.subr.mxu0 0.0
    %424 = vmatpush1.msra.mxu0 %v183
    %425 = vmatprep.subr.mxu0 0.0
    %426 = vmatpush1.msra.mxu0 %v184
    %427 = vmatprep.subr.mxu0 0.0
    %428 = vmatpush1.msra.mxu0 %v185
    %429 = vmatprep.subr.mxu0 0.0
    %430 = vmatpush1.msra.mxu0 0.0
    %431 = vmatprep.subr.mxu0 0.0
    %432 = vmatpush1.msra.mxu0 0.0
    %433 = vmatprep.subr.mxu0 0.0
    %434 = vmatpush1.msra.mxu0 0.0
    %435 = vmatprep.subr.mxu0 0.0
    %436 = vmatpush1.msra.mxu0 0.0
    %437 = vmatprep.subr.mxu0 0.0
    %438 = vmatpush1.msra.mxu0 0.0
    %439 = vmatprep.subr.mxu0 0.0
    %440 = vmatpush1.msra.mxu0 0.0
    %441 = vmatprep.subr.mxu0 0.0
    %442 = vmatpush1.msra.mxu0 0.0
    %443 = vmatprep.subr.mxu0 0.0
    %444 = vmatpush1.msra.mxu0 0.0
    %445 = vmatprep.subr.mxu0 0.0
    %446 = vmatpush1.msra.mxu0 0.0
    %447 = vmatprep.subr.mxu0 0.0
    %448 = vmatpush1.msra.mxu0 0.0
    %449 = vmatprep.subr.mxu0 0.0
    %450 = vmatpush1.msra.mxu0 0.0
    %451 = vmatprep.subr.mxu0 0.0
    %452 = vmatpush1.msra.mxu0 0.0
    %453 = vmatprep.subr.mxu0 0.0
    %454 = vmatpush1.msra.mxu0 0.0
    %455 = vmatprep.subr.mxu0 0.0
    %456 = vmatpush1.msra.mxu0 0.0
    %457 = vmatprep.subr.mxu0 0.0
    %458 = vmatpush1.msra.mxu0 0.0
    %459 = vmatprep.subr.mxu0 0.0
    %460 = vmatpush1.msra.mxu0 0.0
    %461 = vmatprep.subr.mxu0 0.0
    %462 = vmatpush1.msra.mxu0 0.0
    %463 = vmatprep.subr.mxu0 0.0
    %464 = vmatpush1.msra.mxu0 0.0
    %465 = vmatprep.subr.mxu0 0.0
    %466 = vmatpush1.msra.mxu0 0.0
    %467 = vmatprep.subr.mxu0 0.0
    %468 = vmatpush1.msra.mxu0 0.0
    %469 = vmatprep.subr.mxu0 0.0
    %470 = vmatpush1.msra.mxu0 0.0
    %471 = vmatprep.subr.mxu0 0.0
    %472 = vmatpush1.msra.mxu0 0.0
    %473 = vmatprep.subr.mxu0 0.0
    %474 = vmatpush1.msra.mxu0 0.0
    %475 = vmatprep.subr.mxu0 0.0
    %476 = vmatpush1.msra.mxu0 0.0
    %477 = vmatprep.subr.mxu0 0.0
    %478 = vmatpush1.msra.mxu0 0.0
    %479 = vmatprep.subr.mxu0 0.0
    %480 = vmatpush1.msra.mxu0 0.0
    %481 = vmatprep.subr.mxu0 0.0
    %482 = vmatpush1.msra.mxu0 0.0
    %483 = vmatprep.subr.mxu0 0.0
    %484 = vmatpush1.msra.mxu0 0.0
    %485 = vmatprep.mubr.f32.mxu0 0.0
    %486 = vmatmul.mubr.f32.gmra.mrb[0].mxu0 %v419
    %v487 = vpop.f32.mrb[0].mxu0
    %v488 = vadd.f32 0.0, %v487
    %v489 = vpop.f32.mrb[0].mxu0
    %490 = vdwg.mxu0
    %v491 = vadd.f32 %v415, %v488
    %v492 = vxor.u32 %v491, 2147483648
    %v493 = vmul.f32 %v492, 1.442695
    %v494 = vpow.pop %v493
    %v495 = vadd.f32 %v494, 1.0
    %v496 = vrcp.pop %v495
    %v497 = vmul.f32 1.0, %v496
    %v498 = vtanh.pop %v491
    %v499 = vmul.f32 %v497, %v393
    %501 = vrot.lane.b32.xlu0 %v498, 32
    %v502 = vpop.permute.xlu0 %501
    %v504 = vmul.f32 %v497, %v502
    %506 = vrot.lane.b32.xlu0 %v504, 32
    %v507 = vpop.permute.xlu0 %506
    %v509 = vadd.f32 %v499, %v507
    %v510 = vtanh.pop %v509
    %512 = vrot.lane.b32.xlu0 %v510, 32
    %v513 = vpop.permute.xlu0 %512
    %v515 = vmul.f32 %v497, %v513
    %s516 = scalar_lea.vmem %s1, 16
    %v517 = vld [vmem:[%s516] sm:$0xff]
    %519 = vset.pattern.permute.xlu0 0
    %520 = vperm.xlu0 %519, %v517
    %v521 = vpop.permute.xlu0 %520
    %v523 = vmul.f32 %v515, %v521
    %525 = vrot.lane.b32.xlu0 %v523, 64
    %v526 = vpop.permute.xlu0 %525
    %s528 = scalar_lea.vmem [#allocation3], 16
    %529 = vst.msk [vmem:[%s528] sm:$0xff] %vm187, %v526
    %s530 = scalar_lea.vmem [#allocation2], 24
    %v531 = vld [vmem:[%s530] sm:$0xff]
    %533 = vrot.lane.b32.xlu0 %v515, 64
    %v534 = vpop.permute.xlu0 %533
    %v535 = vsel %vm187, %v534, 0
    %537 = vmatprep.subr.mxu0 0.0
    %538 = vmatpush1.msra.mxu0 %v182
    %539 = vmatprep.subr.mxu0 0.0
    %540 = vmatpush1.msra.mxu0 %v183
    %541 = vmatprep.subr.mxu0 0.0
    %542 = vmatpush1.msra.mxu0 %v184
    %543 = vmatprep.subr.mxu0 0.0
    %544 = vmatpush1.msra.mxu0 %v185
    %545 = vmatprep.subr.mxu0 0.0
    %546 = vmatpush1.msra.mxu0 0.0
    %547 = vmatprep.subr.mxu0 0.0
    %548 = vmatpush1.msra.mxu0 0.0
    %549 = vmatprep.subr.mxu0 0.0
    %550 = vmatpush1.msra.mxu0 0.0
    %551 = vmatprep.subr.mxu0 0.0
    %552 = vmatpush1.msra.mxu0 0.0
    %553 = vmatprep.subr.mxu0 0.0
    %554 = vmatpush1.msra.mxu0 0.0
    %555 = vmatprep.subr.mxu0 0.0
    %556 = vmatpush1.msra.mxu0 0.0
    %557 = vmatprep.subr.mxu0 0.0
    %558 = vmatpush1.msra.mxu0 0.0
    %559 = vmatprep.subr.mxu0 0.0
    %560 = vmatpush1.msra.mxu0 0.0
    %561 = vmatprep.subr.mxu0 0.0
    %562 = vmatpush1.msra.mxu0 0.0
    %563 = vmatprep.subr.mxu0 0.0
    %564 = vmatpush1.msra.mxu0 0.0
    %565 = vmatprep.subr.mxu0 0.0
    %566 = vmatpush1.msra.mxu0 0.0
    %567 = vmatprep.subr.mxu0 0.0
    %568 = vmatpush1.msra.mxu0 0.0
    %569 = vmatprep.subr.mxu0 0.0
    %570 = vmatpush1.msra.mxu0 0.0
    %571 = vmatprep.subr.mxu0 0.0
    %572 = vmatpush1.msra.mxu0 0.0
    %573 = vmatprep.subr.mxu0 0.0
    %574 = vmatpush1.msra.mxu0 0.0
    %575 = vmatprep.subr.mxu0 0.0
    %576 = vmatpush1.msra.mxu0 0.0
    %577 = vmatprep.subr.mxu0 0.0
    %578 = vmatpush1.msra.mxu0 0.0
    %579 = vmatprep.subr.mxu0 0.0
    %580 = vmatpush1.msra.mxu0 0.0
    %581 = vmatprep.subr.mxu0 0.0
    %582 = vmatpush1.msra.mxu0 0.0
    %583 = vmatprep.subr.mxu0 0.0
    %584 = vmatpush1.msra.mxu0 0.0
    %585 = vmatprep.subr.mxu0 0.0
    %586 = vmatpush1.msra.mxu0 0.0
    %587 = vmatprep.subr.mxu0 0.0
    %588 = vmatpush1.msra.mxu0 0.0
    %589 = vmatprep.subr.mxu0 0.0
    %590 = vmatpush1.msra.mxu0 0.0
    %591 = vmatprep.subr.mxu0 0.0
    %592 = vmatpush1.msra.mxu0 0.0
    %593 = vmatprep.subr.mxu0 0.0
    %594 = vmatpush1.msra.mxu0 0.0
    %595 = vmatprep.subr.mxu0 0.0
    %596 = vmatpush1.msra.mxu0 0.0
    %597 = vmatprep.subr.mxu0 0.0
    %598 = vmatpush1.msra.mxu0 0.0
    %599 = vmatprep.subr.mxu0 0.0
    %600 = vmatpush1.msra.mxu0 0.0
    %601 = vmatprep.mubr.f32.mxu0 0.0
    %602 = vmatmul.mubr.f32.gmra.mrb[0].mxu0 %v535
    %v603 = vpop.f32.mrb[0].mxu0
    %v604 = vadd.f32 0.0, %v603
    %v605 = vpop.f32.mrb[0].mxu0
    %606 = vdwg.mxu0
    %v607 = vadd.f32 %v531, %v604
    %v608 = vxor.u32 %v607, 2147483648
    %v609 = vmul.f32 %v608, 1.442695
    %v610 = vpow.pop %v609
    %v611 = vadd.f32 %v610, 1.0
    %v612 = vrcp.pop %v611
    %v613 = vmul.f32 1.0, %v612
    %v614 = vtanh.pop %v607
    %v615 = vmul.f32 %v613, %v509
    %617 = vrot.lane.b32.xlu0 %v614, 32
    %v618 = vpop.permute.xlu0 %617
    %v620 = vmul.f32 %v613, %v618
    %622 = vrot.lane.b32.xlu0 %v620, 32
    %v623 = vpop.permute.xlu0 %622
    %v625 = vadd.f32 %v615, %v623
    %v626 = vtanh.pop %v625
    %628 = vrot.lane.b32.xlu0 %v626, 32
    %v629 = vpop.permute.xlu0 %628
    %v631 = vmul.f32 %v613, %v629
    %s632 = scalar_lea.vmem %s1, 24
    %v633 = vld [vmem:[%s632] sm:$0xff]
    %635 = vset.pattern.permute.xlu0 0
    %636 = vperm.xlu0 %635, %v633
    %v637 = vpop.permute.xlu0 %636
    %v639 = vmul.f32 %v631, %v637
    %641 = vrot.lane.b32.xlu0 %v639, 64
    %v642 = vpop.permute.xlu0 %641
    %s644 = scalar_lea.vmem [#allocation3], 24
    %645 = vst.msk [vmem:[%s644] sm:$0xff] %vm187, %v642
    %s646 = scalar_lea.vmem [#allocation2], 32
    %v647 = vld [vmem:[%s646] sm:$0xff]
    %649 = vrot.lane.b32.xlu0 %v631, 64
    %v650 = vpop.permute.xlu0 %649
    %v651 = vsel %vm187, %v650, 0
    %653 = vmatprep.subr.mxu0 0.0
    %654 = vmatpush1.msra.mxu0 %v182
    %655 = vmatprep.subr.mxu0 0.0
    %656 = vmatpush1.msra.mxu0 %v183
    %657 = vmatprep.subr.mxu0 0.0
    %658 = vmatpush1.msra.mxu0 %v184
    %659 = vmatprep.subr.mxu0 0.0
    %660 = vmatpush1.msra.mxu0 %v185
    %661 = vmatprep.subr.mxu0 0.0
    %662 = vmatpush1.msra.mxu0 0.0
    %663 = vmatprep.subr.mxu0 0.0
    %664 = vmatpush1.msra.mxu0 0.0
    %665 = vmatprep.subr.mxu0 0.0
    %666 = vmatpush1.msra.mxu0 0.0
    %667 = vmatprep.subr.mxu0 0.0
    %668 = vmatpush1.msra.mxu0 0.0
    %669 = vmatprep.subr.mxu0 0.0
    %670 = vmatpush1.msra.mxu0 0.0
    %671 = vmatprep.subr.mxu0 0.0
    %672 = vmatpush1.msra.mxu0 0.0
    %673 = vmatprep.subr.mxu0 0.0
    %674 = vmatpush1.msra.mxu0 0.0
    %675 = vmatprep.subr.mxu0 0.0
    %676 = vmatpush1.msra.mxu0 0.0
    %677 = vmatprep.subr.mxu0 0.0
    %678 = vmatpush1.msra.mxu0 0.0
    %679 = vmatprep.subr.mxu0 0.0
    %680 = vmatpush1.msra.mxu0 0.0
    %681 = vmatprep.subr.mxu0 0.0
    %682 = vmatpush1.msra.mxu0 0.0
    %683 = vmatprep.subr.mxu0 0.0
    %684 = vmatpush1.msra.mxu0 0.0
    %685 = vmatprep.subr.mxu0 0.0
    %686 = vmatpush1.msra.mxu0 0.0
    %687 = vmatprep.subr.mxu0 0.0
    %688 = vmatpush1.msra.mxu0 0.0
    %689 = vmatprep.subr.mxu0 0.0
    %690 = vmatpush1.msra.mxu0 0.0
    %691 = vmatprep.subr.mxu0 0.0
    %692 = vmatpush1.msra.mxu0 0.0
    %693 = vmatprep.subr.mxu0 0.0
    %694 = vmatpush1.msra.mxu0 0.0
    %695 = vmatprep.subr.mxu0 0.0
    %696 = vmatpush1.msra.mxu0 0.0
    %697 = vmatprep.subr.mxu0 0.0
    %698 = vmatpush1.msra.mxu0 0.0
    %699 = vmatprep.subr.mxu0 0.0
    %700 = vmatpush1.msra.mxu0 0.0
    %701 = vmatprep.subr.mxu0 0.0
    %702 = vmatpush1.msra.mxu0 0.0
    %703 = vmatprep.subr.mxu0 0.0
    %704 = vmatpush1.msra.mxu0 0.0
    %705 = vmatprep.subr.mxu0 0.0
    %706 = vmatpush1.msra.mxu0 0.0
    %707 = vmatprep.subr.mxu0 0.0
    %708 = vmatpush1.msra.mxu0 0.0
    %709 = vmatprep.subr.mxu0 0.0
    %710 = vmatpush1.msra.mxu0 0.0
    %711 = vmatprep.subr.mxu0 0.0
    %712 = vmatpush1.msra.mxu0 0.0
    %713 = vmatprep.subr.mxu0 0.0
    %714 = vmatpush1.msra.mxu0 0.0
    %715 = vmatprep.subr.mxu0 0.0
    %716 = vmatpush1.msra.mxu0 0.0
    %717 = vmatprep.mubr.f32.mxu0 0.0
    %718 = vmatmul.mubr.f32.gmra.mrb[0].mxu0 %v651
    %v719 = vpop.f32.mrb[0].mxu0
    %v720 = vadd.f32 0.0, %v719
    %v721 = vpop.f32.mrb[0].mxu0
    %722 = vdwg.mxu0
    %v723 = vadd.f32 %v647, %v720
    %v724 = vxor.u32 %v723, 2147483648
    %v725 = vmul.f32 %v724, 1.442695
    %v726 = vpow.pop %v725
    %v727 = vadd.f32 %v726, 1.0
    %v728 = vrcp.pop %v727
    %v729 = vmul.f32 1.0, %v728
    %v730 = vtanh.pop %v723
    %v731 = vmul.f32 %v729, %v625
    %733 = vrot.lane.b32.xlu0 %v730, 32
    %v734 = vpop.permute.xlu0 %733
    %v736 = vmul.f32 %v729, %v734
    %738 = vrot.lane.b32.xlu0 %v736, 32
    %v739 = vpop.permute.xlu0 %738
    %v741 = vadd.f32 %v731, %v739
    %v742 = vtanh.pop %v741
    %744 = vrot.lane.b32.xlu0 %v742, 32
    %v745 = vpop.permute.xlu0 %744
    %v747 = vmul.f32 %v729, %v745
    %s748 = scalar_lea.vmem %s1, 32
    %v749 = vld [vmem:[%s748] sm:$0xff]
    %751 = vset.pattern.permute.xlu0 0
    %752 = vperm.xlu0 %751, %v749
    %v753 = vpop.permute.xlu0 %752
    %v755 = vmul.f32 %v747, %v753
    %757 = vrot.lane.b32.xlu0 %v755, 64
    %v758 = vpop.permute.xlu0 %757
    %s760 = scalar_lea.vmem [#allocation3], 32
    %761 = vst.msk [vmem:[%s760] sm:$0xff] %vm187, %v758
    %s762 = scalar_lea.vmem [#allocation2], 40
    %v763 = vld [vmem:[%s762] sm:$0xff]
    %765 = vrot.lane.b32.xlu0 %v747, 64
    %v766 = vpop.permute.xlu0 %765
    %v767 = vsel %vm187, %v766, 0
    %769 = vmatprep.subr.mxu0 0.0
    %770 = vmatpush1.msra.mxu0 %v182
    %771 = vmatprep.subr.mxu0 0.0
    %772 = vmatpush1.msra.mxu0 %v183
    %773 = vmatprep.subr.mxu0 0.0
    %774 = vmatpush1.msra.mxu0 %v184
    %775 = vmatprep.subr.mxu0 0.0
    %776 = vmatpush1.msra.mxu0 %v185
    %777 = vmatprep.subr.mxu0 0.0
    %778 = vmatpush1.msra.mxu0 0.0
    %779 = vmatprep.subr.mxu0 0.0
    %780 = vmatpush1.msra.mxu0 0.0
    %781 = vmatprep.subr.mxu0 0.0
    %782 = vmatpush1.msra.mxu0 0.0
    %783 = vmatprep.subr.mxu0 0.0
    %784 = vmatpush1.msra.mxu0 0.0
    %785 = vmatprep.subr.mxu0 0.0
    %786 = vmatpush1.msra.mxu0 0.0
    %787 = vmatprep.subr.mxu0 0.0
    %788 = vmatpush1.msra.mxu0 0.0
    %789 = vmatprep.subr.mxu0 0.0
    %790 = vmatpush1.msra.mxu0 0.0
    %791 = vmatprep.subr.mxu0 0.0
    %792 = vmatpush1.msra.mxu0 0.0
    %793 = vmatprep.subr.mxu0 0.0
    %794 = vmatpush1.msra.mxu0 0.0
    %795 = vmatprep.subr.mxu0 0.0
    %796 = vmatpush1.msra.mxu0 0.0
    %797 = vmatprep.subr.mxu0 0.0
    %798 = vmatpush1.msra.mxu0 0.0
    %799 = vmatprep.subr.mxu0 0.0
    %800 = vmatpush1.msra.mxu0 0.0
    %801 = vmatprep.subr.mxu0 0.0
    %802 = vmatpush1.msra.mxu0 0.0
    %803 = vmatprep.subr.mxu0 0.0
    %804 = vmatpush1.msra.mxu0 0.0
    %805 = vmatprep.subr.mxu0 0.0
    %806 = vmatpush1.msra.mxu0 0.0
    %807 = vmatprep.subr.mxu0 0.0
    %808 = vmatpush1.msra.mxu0 0.0
    %809 = vmatprep.subr.mxu0 0.0
    %810 = vmatpush1.msra.mxu0 0.0
    %811 = vmatprep.subr.mxu0 0.0
    %812 = vmatpush1.msra.mxu0 0.0
    %813 = vmatprep.subr.mxu0 0.0
    %814 = vmatpush1.msra.mxu0 0.0
    %815 = vmatprep.subr.mxu0 0.0
    %816 = vmatpush1.msra.mxu0 0.0
    %817 = vmatprep.subr.mxu0 0.0
    %818 = vmatpush1.msra.mxu0 0.0
    %819 = vmatprep.subr.mxu0 0.0
    %820 = vmatpush1.msra.mxu0 0.0
    %821 = vmatprep.subr.mxu0 0.0
    %822 = vmatpush1.msra.mxu0 0.0
    %823 = vmatprep.subr.mxu0 0.0
    %824 = vmatpush1.msra.mxu0 0.0
    %825 = vmatprep.subr.mxu0 0.0
    %826 = vmatpush1.msra.mxu0 0.0
    %827 = vmatprep.subr.mxu0 0.0
    %828 = vmatpush1.msra.mxu0 0.0
    %829 = vmatprep.subr.mxu0 0.0
    %830 = vmatpush1.msra.mxu0 0.0
    %831 = vmatprep.subr.mxu0 0.0
    %832 = vmatpush1.msra.mxu0 0.0
    %833 = vmatprep.mubr.f32.mxu0 0.0
    %834 = vmatmul.mubr.f32.gmra.mrb[0].mxu0 %v767
    %v835 = vpop.f32.mrb[0].mxu0
    %v836 = vadd.f32 0.0, %v835
    %v837 = vpop.f32.mrb[0].mxu0
    %838 = vdwg.mxu0
    %v839 = vadd.f32 %v763, %v836
    %v840 = vxor.u32 %v839, 2147483648
    %v841 = vmul.f32 %v840, 1.442695
    %v842 = vpow.pop %v841
    %v843 = vadd.f32 %v842, 1.0
    %v844 = vrcp.pop %v843
    %v845 = vmul.f32 1.0, %v844
    %v846 = vtanh.pop %v839
    %v847 = vmul.f32 %v845, %v741
    %849 = vrot.lane.b32.xlu0 %v846, 32
    %v850 = vpop.permute.xlu0 %849
    %v852 = vmul.f32 %v845, %v850
    %854 = vrot.lane.b32.xlu0 %v852, 32
    %v855 = vpop.permute.xlu0 %854
    %v857 = vadd.f32 %v847, %v855
    %v858 = vtanh.pop %v857
    %860 = vrot.lane.b32.xlu0 %v858, 32
    %v861 = vpop.permute.xlu0 %860
    %v863 = vmul.f32 %v845, %v861
    %s864 = scalar_lea.vmem %s1, 40
    %v865 = vld [vmem:[%s864] sm:$0xff]
    %867 = vset.pattern.permute.xlu0 0
    %868 = vperm.xlu0 %867, %v865
    %v869 = vpop.permute.xlu0 %868
    %v871 = vmul.f32 %v863, %v869
    %873 = vrot.lane.b32.xlu0 %v871, 64
    %v874 = vpop.permute.xlu0 %873
    %s876 = scalar_lea.vmem [#allocation3], 40
    %877 = vst.msk [vmem:[%s876] sm:$0xff] %vm187, %v874
    %s878 = scalar_lea.vmem [#allocation2], 48
    %v879 = vld [vmem:[%s878] sm:$0xff]
    %881 = vrot.lane.b32.xlu0 %v863, 64
    %v882 = vpop.permute.xlu0 %881
    %v883 = vsel %vm187, %v882, 0
    %885 = vmatprep.subr.mxu0 0.0
    %886 = vmatpush1.msra.mxu0 %v182
    %887 = vmatprep.subr.mxu0 0.0
    %888 = vmatpush1.msra.mxu0 %v183
    %889 = vmatprep.subr.mxu0 0.0
    %890 = vmatpush1.msra.mxu0 %v184
    %891 = vmatprep.subr.mxu0 0.0
    %892 = vmatpush1.msra.mxu0 %v185
    %893 = vmatprep.subr.mxu0 0.0
    %894 = vmatpush1.msra.mxu0 0.0
    %895 = vmatprep.subr.mxu0 0.0
    %896 = vmatpush1.msra.mxu0 0.0
    %897 = vmatprep.subr.mxu0 0.0
    %898 = vmatpush1.msra.mxu0 0.0
    %899 = vmatprep.subr.mxu0 0.0
    %900 = vmatpush1.msra.mxu0 0.0
    %901 = vmatprep.subr.mxu0 0.0
    %902 = vmatpush1.msra.mxu0 0.0
    %903 = vmatprep.subr.mxu0 0.0
    %904 = vmatpush1.msra.mxu0 0.0
    %905 = vmatprep.subr.mxu0 0.0
    %906 = vmatpush1.msra.mxu0 0.0
    %907 = vmatprep.subr.mxu0 0.0
    %908 = vmatpush1.msra.mxu0 0.0
    %909 = vmatprep.subr.mxu0 0.0
    %910 = vmatpush1.msra.mxu0 0.0
    %911 = vmatprep.subr.mxu0 0.0
    %912 = vmatpush1.msra.mxu0 0.0
    %913 = vmatprep.subr.mxu0 0.0
    %914 = vmatpush1.msra.mxu0 0.0
    %915 = vmatprep.subr.mxu0 0.0
    %916 = vmatpush1.msra.mxu0 0.0
    %917 = vmatprep.subr.mxu0 0.0
    %918 = vmatpush1.msra.mxu0 0.0
    %919 = vmatprep.subr.mxu0 0.0
    %920 = vmatpush1.msra.mxu0 0.0
    %921 = vmatprep.subr.mxu0 0.0
    %922 = vmatpush1.msra.mxu0 0.0
    %923 = vmatprep.subr.mxu0 0.0
    %924 = vmatpush1.msra.mxu0 0.0
    %925 = vmatprep.subr.mxu0 0.0
    %926 = vmatpush1.msra.mxu0 0.0
    %927 = vmatprep.subr.mxu0 0.0
    %928 = vmatpush1.msra.mxu0 0.0
    %929 = vmatprep.subr.mxu0 0.0
    %930 = vmatpush1.msra.mxu0 0.0
    %931 = vmatprep.subr.mxu0 0.0
    %932 = vmatpush1.msra.mxu0 0.0
    %933 = vmatprep.subr.mxu0 0.0
    %934 = vmatpush1.msra.mxu0 0.0
    %935 = vmatprep.subr.mxu0 0.0
    %936 = vmatpush1.msra.mxu0 0.0
    %937 = vmatprep.subr.mxu0 0.0
    %938 = vmatpush1.msra.mxu0 0.0
    %939 = vmatprep.subr.mxu0 0.0
    %940 = vmatpush1.msra.mxu0 0.0
    %941 = vmatprep.subr.mxu0 0.0
    %942 = vmatpush1.msra.mxu0 0.0
    %943 = vmatprep.subr.mxu0 0.0
    %944 = vmatpush1.msra.mxu0 0.0
    %945 = vmatprep.subr.mxu0 0.0
    %946 = vmatpush1.msra.mxu0 0.0
    %947 = vmatprep.subr.mxu0 0.0
    %948 = vmatpush1.msra.mxu0 0.0
    %949 = vmatprep.mubr.f32.mxu0 0.0
    %950 = vmatmul.mubr.f32.gmra.mrb[0].mxu0 %v883
    %v951 = vpop.f32.mrb[0].mxu0
    %v952 = vadd.f32 0.0, %v951
    %v953 = vpop.f32.mrb[0].mxu0
    %954 = vdwg.mxu0
    %v955 = vadd.f32 %v879, %v952
    %v956 = vxor.u32 %v955, 2147483648
    %v957 = vmul.f32 %v956, 1.442695
    %v958 = vpow.pop %v957
    %v959 = vadd.f32 %v958, 1.0
    %v960 = vrcp.pop %v959
    %v961 = vmul.f32 1.0, %v960
    %v962 = vtanh.pop %v955
    %v963 = vmul.f32 %v961, %v857
    %965 = vrot.lane.b32.xlu0 %v962, 32
    %v966 = vpop.permute.xlu0 %965
    %v968 = vmul.f32 %v961, %v966
    %970 = vrot.lane.b32.xlu0 %v968, 32
    %v971 = vpop.permute.xlu0 %970
    %v973 = vadd.f32 %v963, %v971
    %v974 = vtanh.pop %v973
    %976 = vrot.lane.b32.xlu0 %v974, 32
    %v977 = vpop.permute.xlu0 %976
    %v979 = vmul.f32 %v961, %v977
    %s980 = scalar_lea.vmem %s1, 48
    %v981 = vld [vmem:[%s980] sm:$0xff]
    %983 = vset.pattern.permute.xlu0 0
    %984 = vperm.xlu0 %983, %v981
    %v985 = vpop.permute.xlu0 %984
    %v987 = vmul.f32 %v979, %v985
    %989 = vrot.lane.b32.xlu0 %v987, 64
    %v990 = vpop.permute.xlu0 %989
    %s992 = scalar_lea.vmem [#allocation3], 48
    %993 = vst.msk [vmem:[%s992] sm:$0xff] %vm187, %v990
    %s994 = scalar_lea.vmem [#allocation2], 56
    %v995 = vld [vmem:[%s994] sm:$0xff]
    %997 = vrot.lane.b32.xlu0 %v979, 64
    %v998 = vpop.permute.xlu0 %997
    %v999 = vsel %vm187, %v998, 0
    %1001 = vmatprep.subr.mxu0 0.0
    %1002 = vmatpush1.msra.mxu0 %v182
    %1003 = vmatprep.subr.mxu0 0.0
    %1004 = vmatpush1.msra.mxu0 %v183
    %1005 = vmatprep.subr.mxu0 0.0
    %1006 = vmatpush1.msra.mxu0 %v184
    %1007 = vmatprep.subr.mxu0 0.0
    %1008 = vmatpush1.msra.mxu0 %v185
    %1009 = vmatprep.subr.mxu0 0.0
    %1010 = vmatpush1.msra.mxu0 0.0
    %1011 = vmatprep.subr.mxu0 0.0
    %1012 = vmatpush1.msra.mxu0 0.0
    %1013 = vmatprep.subr.mxu0 0.0
    %1014 = vmatpush1.msra.mxu0 0.0
    %1015 = vmatprep.subr.mxu0 0.0
    %1016 = vmatpush1.msra.mxu0 0.0
    %1017 = vmatprep.subr.mxu0 0.0
    %1018 = vmatpush1.msra.mxu0 0.0
    %1019 = vmatprep.subr.mxu0 0.0
    %1020 = vmatpush1.msra.mxu0 0.0
    %1021 = vmatprep.subr.mxu0 0.0
    %1022 = vmatpush1.msra.mxu0 0.0
    %1023 = vmatprep.subr.mxu0 0.0
    %1024 = vmatpush1.msra.mxu0 0.0
    %1025 = vmatprep.subr.mxu0 0.0
    %1026 = vmatpush1.msra.mxu0 0.0
    %1027 = vmatprep.subr.mxu0 0.0
    %1028 = vmatpush1.msra.mxu0 0.0
    %1029 = vmatprep.subr.mxu0 0.0
    %1030 = vmatpush1.msra.mxu0 0.0
    %1031 = vmatprep.subr.mxu0 0.0
    %1032 = vmatpush1.msra.mxu0 0.0
    %1033 = vmatprep.subr.mxu0 0.0
    %1034 = vmatpush1.msra.mxu0 0.0
    %1035 = vmatprep.subr.mxu0 0.0
    %1036 = vmatpush1.msra.mxu0 0.0
    %1037 = vmatprep.subr.mxu0 0.0
    %1038 = vmatpush1.msra.mxu0 0.0
    %1039 = vmatprep.subr.mxu0 0.0
    %1040 = vmatpush1.msra.mxu0 0.0
    %1041 = vmatprep.subr.mxu0 0.0
    %1042 = vmatpush1.msra.mxu0 0.0
    %1043 = vmatprep.subr.mxu0 0.0
    %1044 = vmatpush1.msra.mxu0 0.0
    %1045 = vmatprep.subr.mxu0 0.0
    %1046 = vmatpush1.msra.mxu0 0.0
    %1047 = vmatprep.subr.mxu0 0.0
    %1048 = vmatpush1.msra.mxu0 0.0
    %1049 = vmatprep.subr.mxu0 0.0
    %1050 = vmatpush1.msra.mxu0 0.0
    %1051 = vmatprep.subr.mxu0 0.0
    %1052 = vmatpush1.msra.mxu0 0.0
    %1053 = vmatprep.subr.mxu0 0.0
    %1054 = vmatpush1.msra.mxu0 0.0
    %1055 = vmatprep.subr.mxu0 0.0
    %1056 = vmatpush1.msra.mxu0 0.0
    %1057 = vmatprep.subr.mxu0 0.0
    %1058 = vmatpush1.msra.mxu0 0.0
    %1059 = vmatprep.subr.mxu0 0.0
    %1060 = vmatpush1.msra.mxu0 0.0
    %1061 = vmatprep.subr.mxu0 0.0
    %1062 = vmatpush1.msra.mxu0 0.0
    %1063 = vmatprep.subr.mxu0 0.0
    %1064 = vmatpush1.msra.mxu0 0.0
    %1065 = vmatprep.mubr.f32.mxu0 0.0
    %1066 = vmatmul.mubr.f32.gmra.mrb[0].mxu0 %v999
    %v1067 = vpop.f32.mrb[0].mxu0
    %v1068 = vadd.f32 0.0, %v1067
    %v1069 = vpop.f32.mrb[0].mxu0
    %1070 = vdwg.mxu0
    %v1071 = vadd.f32 %v995, %v1068
    %v1072 = vxor.u32 %v1071, 2147483648
    %v1073 = vmul.f32 %v1072, 1.442695
    %v1074 = vpow.pop %v1073
    %v1075 = vadd.f32 %v1074, 1.0
    %v1076 = vrcp.pop %v1075
    %v1077 = vmul.f32 1.0, %v1076
    %v1078 = vtanh.pop %v1071
    %v1079 = vmul.f32 %v1077, %v973
    %1081 = vrot.lane.b32.xlu0 %v1078, 32
    %v1082 = vpop.permute.xlu0 %1081
    %v1084 = vmul.f32 %v1077, %v1082
    %1086 = vrot.lane.b32.xlu0 %v1084, 32
    %v1087 = vpop.permute.xlu0 %1086
    %v1089 = vadd.f32 %v1079, %v1087
    %v1090 = vtanh.pop %v1089
    %1092 = vrot.lane.b32.xlu0 %v1090, 32
    %v1093 = vpop.permute.xlu0 %1092
    %v1095 = vmul.f32 %v1077, %v1093
    %s1096 = scalar_lea.vmem %s1, 56
    %v1097 = vld [vmem:[%s1096] sm:$0xff]
    %1099 = vset.pattern.permute.xlu0 0
    %1100 = vperm.xlu0 %1099, %v1097
    %v1101 = vpop.permute.xlu0 %1100
    %v1103 = vmul.f32 %v1095, %v1101
    %1105 = vrot.lane.b32.xlu0 %v1103, 64
    %v1106 = vpop.permute.xlu0 %1105
    %s1108 = scalar_lea.vmem [#allocation3], 56
    %1109 = vst.msk [vmem:[%s1108] sm:$0xff] %vm187, %v1106
    %v1110 = vld [vmem:[#allocation3] sm:$0xff]
    %v1111 = vld [vmem:[#allocation3 + $0x8] sm:$0xff]
    %v1112 = vld [vmem:[#allocation3 + $0x10] sm:$0xff]
    %v1113 = vld [vmem:[#allocation3 + $0x18] sm:$0xff]
    %v1114 = vld [vmem:[#allocation3 + $0x20] sm:$0xff]
    %v1115 = vld [vmem:[#allocation3 + $0x28] sm:$0xff]
    %v1116 = vld [vmem:[#allocation3 + $0x30] sm:$0xff]
    %v1117 = vld [vmem:[#allocation3 + $0x38] sm:$0xff]
    %v1118 = vld [vmem:[%s5] sm:$0xff]
    %v1119 = vld [vmem:[%s5 + $0x8] sm:$0xff]
    %v1120 = vld [vmem:[%s5 + $0x10] sm:$0xff]
    %v1121 = vld [vmem:[%s5 + $0x18] sm:$0xff]
    %v1122 = vld [vmem:[%s6] sm:$0x1]
    %v1124 = vlaneseq
    %v1125 = vshrl.u32 %v1124, 7
    %v1126 = vsub.s32 0, %v1125
    %v1127 = vrot.slane %v1122, %v1126
    %v1130 = vsel %vm187, %v1110, 0
    %v1133 = vsel %vm187, %v1111, 0
    %v1136 = vsel %vm187, %v1112, 0
    %v1139 = vsel %vm187, %v1113, 0
    %v1142 = vsel %vm187, %v1114, 0
    %v1145 = vsel %vm187, %v1115, 0
    %v1148 = vsel %vm187, %v1116, 0
    %v1151 = vsel %vm187, %v1117, 0
    %1153 = vmatprep.subr.mxu0 0.0
    %1154 = vmatpush1.msra.mxu0 %v1118
    %1155 = vmatprep.subr.mxu0 0.0
    %1156 = vmatpush1.msra.mxu0 %v1119
    %1157 = vmatprep.subr.mxu0 0.0
    %1158 = vmatpush1.msra.mxu0 %v1120
    %1159 = vmatprep.subr.mxu0 0.0
    %1160 = vmatpush1.msra.mxu0 %v1121
    %1161 = vmatprep.subr.mxu0 0.0
    %1162 = vmatpush1.msra.mxu0 0.0
    %1163 = vmatprep.subr.mxu0 0.0
    %1164 = vmatpush1.msra.mxu0 0.0
    %1165 = vmatprep.subr.mxu0 0.0
    %1166 = vmatpush1.msra.mxu0 0.0
    %1167 = vmatprep.subr.mxu0 0.0
    %1168 = vmatpush1.msra.mxu0 0.0
    %1169 = vmatprep.subr.mxu0 0.0
    %1170 = vmatpush1.msra.mxu0 0.0
    %1171 = vmatprep.subr.mxu0 0.0
    %1172 = vmatpush1.msra.mxu0 0.0
    %1173 = vmatprep.subr.mxu0 0.0
    %1174 = vmatpush1.msra.mxu0 0.0
    %1175 = vmatprep.subr.mxu0 0.0
    %1176 = vmatpush1.msra.mxu0 0.0
    %1177 = vmatprep.subr.mxu0 0.0
    %1178 = vmatpush1.msra.mxu0 0.0
    %1179 = vmatprep.subr.mxu0 0.0
    %1180 = vmatpush1.msra.mxu0 0.0
    %1181 = vmatprep.subr.mxu0 0.0
    %1182 = vmatpush1.msra.mxu0 0.0
    %1183 = vmatprep.subr.mxu0 0.0
    %1184 = vmatpush1.msra.mxu0 0.0
    %1185 = vmatprep.subr.mxu0 0.0
    %1186 = vmatpush1.msra.mxu0 0.0
    %1187 = vmatprep.subr.mxu0 0.0
    %1188 = vmatpush1.msra.mxu0 0.0
    %1189 = vmatprep.subr.mxu0 0.0
    %1190 = vmatpush1.msra.mxu0 0.0
    %1191 = vmatprep.subr.mxu0 0.0
    %1192 = vmatpush1.msra.mxu0 0.0
    %1193 = vmatprep.subr.mxu0 0.0
    %1194 = vmatpush1.msra.mxu0 0.0
    %1195 = vmatprep.subr.mxu0 0.0
    %1196 = vmatpush1.msra.mxu0 0.0
    %1197 = vmatprep.subr.mxu0 0.0
    %1198 = vmatpush1.msra.mxu0 0.0
    %1199 = vmatprep.subr.mxu0 0.0
    %1200 = vmatpush1.msra.mxu0 0.0
    %1201 = vmatprep.subr.mxu0 0.0
    %1202 = vmatpush1.msra.mxu0 0.0
    %1203 = vmatprep.subr.mxu0 0.0
    %1204 = vmatpush1.msra.mxu0 0.0
    %1205 = vmatprep.subr.mxu0 0.0
    %1206 = vmatpush1.msra.mxu0 0.0
    %1207 = vmatprep.subr.mxu0 0.0
    %1208 = vmatpush1.msra.mxu0 0.0
    %1209 = vmatprep.subr.mxu0 0.0
    %1210 = vmatpush1.msra.mxu0 0.0
    %1211 = vmatprep.subr.mxu0 0.0
    %1212 = vmatpush1.msra.mxu0 0.0
    %1213 = vmatprep.subr.mxu0 0.0
    %1214 = vmatpush1.msra.mxu0 0.0
    %1215 = vmatprep.subr.mxu0 0.0
    %1216 = vmatpush1.msra.mxu0 0.0
    %1217 = vmatprep.mubr.f32.mxu0 0.0
    %1218 = vmatmul.mubr.f32.gmra.mrb[0].mxu0 %v1130
    %v1219 = vpop.f32.mrb[0].mxu0
    %v1220 = vadd.f32 %v1127, %v1219
    %v1221 = vpop.f32.mrb[0].mxu0
    %1222 = vmatprep.mubr.f32.mxu0 0.0
    %1223 = vmatmul.mubr.f32.gmra.mrb[0].mxu0 %v1133
    %v1224 = vpop.f32.mrb[0].mxu0
    %v1225 = vadd.f32 %v1127, %v1224
    %v1226 = vpop.f32.mrb[0].mxu0
    %1227 = vmatprep.mubr.f32.mxu0 0.0
    %1228 = vmatmul.mubr.f32.gmra.mrb[0].mxu0 %v1136
    %v1229 = vpop.f32.mrb[0].mxu0
    %v1230 = vadd.f32 %v1127, %v1229
    %v1231 = vpop.f32.mrb[0].mxu0
    %1232 = vmatprep.mubr.f32.mxu0 0.0
    %1233 = vmatmul.mubr.f32.gmra.mrb[0].mxu0 %v1139
    %v1234 = vpop.f32.mrb[0].mxu0
    %v1235 = vadd.f32 %v1127, %v1234
    %v1236 = vpop.f32.mrb[0].mxu0
    %1237 = vmatprep.mubr.f32.mxu0 0.0
    %1238 = vmatmul.mubr.f32.gmra.mrb[0].mxu0 %v1142
    %v1239 = vpop.f32.mrb[0].mxu0
    %v1240 = vadd.f32 %v1127, %v1239
    %v1241 = vpop.f32.mrb[0].mxu0
    %1242 = vmatprep.mubr.f32.mxu0 0.0
    %1243 = vmatmul.mubr.f32.gmra.mrb[0].mxu0 %v1145
    %v1244 = vpop.f32.mrb[0].mxu0
    %v1245 = vadd.f32 %v1127, %v1244
    %v1246 = vpop.f32.mrb[0].mxu0
    %1247 = vmatprep.mubr.f32.mxu0 0.0
    %1248 = vmatmul.mubr.f32.gmra.mrb[0].mxu0 %v1148
    %v1249 = vpop.f32.mrb[0].mxu0
    %v1250 = vadd.f32 %v1127, %v1249
    %v1251 = vpop.f32.mrb[0].mxu0
    %1252 = vmatprep.mubr.f32.mxu0 0.0
    %1253 = vmatmul.mubr.f32.gmra.mrb[0].mxu0 %v1151
    %v1254 = vpop.f32.mrb[0].mxu0
    %v1255 = vadd.f32 %v1127, %v1254
    %v1256 = vpop.f32.mrb[0].mxu0
    %1257 = vdwg.mxu0
    %v1258 = vtanh.pop %v1220
    %v1259 = vtanh.pop %v1225
    %v1260 = vtanh.pop %v1230
    %v1261 = vtanh.pop %v1235
    %v1262 = vtanh.pop %v1240
    %v1263 = vtanh.pop %v1245
    %v1264 = vtanh.pop %v1250
    %v1265 = vtanh.pop %v1255
    %1266 = vst [vmem:[#allocation4] sm:$0xff] %v1258
    %1267 = vst [vmem:[#allocation4 + $0x8] sm:$0xff] %v1259
    %1268 = vst [vmem:[#allocation4 + $0x10] sm:$0xff] %v1260
    %1269 = vst [vmem:[#allocation4 + $0x18] sm:$0xff] %v1261
    %1270 = vst [vmem:[#allocation4 + $0x20] sm:$0xff] %v1262
    %1271 = vst [vmem:[#allocation4 + $0x28] sm:$0xff] %v1263
    %1272 = vst [vmem:[#allocation4 + $0x30] sm:$0xff] %v1264
    %1273 = vst [vmem:[#allocation4 + $0x38] sm:$0xff] %v1265
    // Predicated region
    $region30: #{tpu_custom_call.1} parent=1 // pred_check
      _
    $region31: #{tpu_custom_call.1} parent=1 // pred_check_branch
      %1275 = sbr.rel (0) target = $region33
    $region32: #{tpu_custom_call.1} parent=1 // pred_region
      %s1277 = ssub.s32 1024, 1024
      %1278 = vsyncadd [#allocation5], %s1277
      %s1279 = sshll.u32 [#allocation4], 4
      %s1280 = int_to_ptr.vmem [resolvable:$true] %s1279
      %1285 = dma.vmem_to_hbm [thread:$0]  %s1280, 1024, %s7, [#allocation5], 128, 128, 8
    $region33: #{tpu_custom_call.1} parent=1 // pred_fallthru
      _
    // Predicated region
    $region34: #{tpu_custom_call.1} parent=1 // pred_check
      _
    $region35: #{tpu_custom_call.1} parent=1 // pred_check_branch
      %1287 = sbr.rel (0) target = $region37
    $region36: #{tpu_custom_call.1} parent=1 // pred_region
      %1288 = dma.done [#allocation5], 1024
    $region37: #{tpu_custom_call.1} parent=1 // pred_fallthru
      _
    %1289 = vsyncpa [#allocation5], 1

</llo_original>
